<compile_context>
chip_gen: v5e
topology: v5e:2x2
jax: 0.10.0
libtpu: 0.0.40
codegen_flags: <defaults>
</compile_context>

<pallas_src>
import jax
import jax.numpy as jnp
from jax.experimental import pallas as pl
from jax.experimental.pallas import tpu as pltpu

# ---- model dimensions (from GCN_JKNet.__init__) ----
HID = 16                      # GCN hidden channels
LSTM_H = (4 * HID) // 2       # JumpingKnowledge(lstm, channels=16, num_layers=4) -> hidden 32
GATE_W = 4 * LSTM_H           # 128 : packed [i|f|g|o] gate width per direction
SLAB_W = 2 * GATE_W           # 256 : fused fwd|bwd lane width


def _make_kernel(f_in, n_classes, rows):
    r_wih, r_whh, r_w1, r_w2, r_wlin = rows
    f32 = jnp.float32
    bf16 = jnp.bfloat16

    def activate(g):
        # g: [N, 128] packed gate pre-activations [i|f|g|o]; tanh on the g band,
        # sigmoid elsewhere, computed on the packed block (lane-masked select on full vregs).
        lane = jax.lax.broadcasted_iota(jnp.int32, g.shape, 1)
        tanh_band = jnp.logical_and(lane >= 2 * LSTM_H, lane < 3 * LSTM_H)
        sig = pl.reciprocal(1.0 + jnp.exp(-g), approx=True)
        return jnp.where(tanh_band, jnp.tanh(g), sig)

    def cell_update(act, c_prev=None):
        i = act[:, 0:LSTM_H]
        f = act[:, LSTM_H:2 * LSTM_H]
        g = act[:, 2 * LSTM_H:3 * LSTM_H]
        o = act[:, 3 * LSTM_H:4 * LSTM_H]
        c = i * g if c_prev is None else f * c_prev + i * g
        return o * jnp.tanh(c), c

    def kernel(a_ref, x_ref, w_ref, b_ref, out_ref):
        A = a_ref[...]                 # [N, N] bf16 gcn-normalized adjacency (with self loops)
        X = x_ref[...]                 # [N, Fin] bf16

        # static slices of the packed f32 bias slab
        b1 = b_ref[1:2, 0:HID]
        b2 = b_ref[1:2, HID:2 * HID]
        blin = b_ref[1:2, 2 * HID:2 * HID + n_classes]
        batt = b_ref[1:2, 2 * HID + n_classes:2 * HID + n_classes + 1]
        watt = b_ref[2:3, 0:2 * LSTM_H]
        b_cat = b_ref[0:1, :]          # [1, 256] = [b_f | b_b]  (b_ih + b_hh folded)

        # --- GCNConv1: relu(A_hat @ (X W1) + b1)   (dropout = identity in eval) ---
        h1 = jnp.dot(X, w_ref[r_w1:r_w1 + f_in, 0:HID], preferred_element_type=f32)
        x1 = jnp.maximum(jnp.dot(A, h1.astype(bf16), preferred_element_type=f32) + b1, 0.0)
        x1b = x1.astype(bf16)

        # --- GCNConv2 ---
        h2 = jnp.dot(x1b, w_ref[r_w2:r_w2 + HID, 0:HID], preferred_element_type=f32)
        x2 = jnp.maximum(jnp.dot(A, h2.astype(bf16), preferred_element_type=f32) + b2, 0.0)
        x2b = x2.astype(bf16)

        # --- JumpingKnowledge(mode='lstm'): bi-LSTM over the length-2 sequence [x1, x2] ---
        # fused fwd|bwd input projections: one [HID, 256] RHS, x1 / x2 each projected once
        w_ih = w_ref[r_wih:r_wih + HID, :]                              # [HID, 256] bf16
        g1 = jnp.dot(x1b, w_ih, preferred_element_type=f32) + b_cat    # [N, 256]
        g2 = jnp.dot(x2b, w_ih, preferred_element_type=f32) + b_cat

        whh_f = w_ref[r_whh:r_whh + LSTM_H, 0:GATE_W]                  # [32, 128] bf16
        whh_b = w_ref[r_whh:r_whh + LSTM_H, GATE_W:SLAB_W]

        # first cell of each direction: h = c = 0 (skip recurrent matmul and f*c term)
        hf0, cf0 = cell_update(activate(g1[:, 0:GATE_W]))
        hb1, cb1 = cell_update(activate(g2[:, GATE_W:SLAB_W]))
        # second cells (recurrent term added, then activated)
        gf = g2[:, 0:GATE_W] + jnp.dot(hf0.astype(bf16), whh_f, preferred_element_type=f32)
        hf1, _ = cell_update(activate(gf), cf0)
        gb = g1[:, GATE_W:SLAB_W] + jnp.dot(hb1.astype(bf16), whh_b, preferred_element_type=f32)
        hb0, _ = cell_update(activate(gb), cb1)

        # attention Linear(2*LSTM_H, 1) per time step + softmax over the 2 time steps
        watt_f = watt[:, 0:LSTM_H]
        watt_b = watt[:, LSTM_H:2 * LSTM_H]
        a0 = jnp.sum(hf0 * watt_f + hb0 * watt_b, axis=1, keepdims=True) + batt
        a1 = jnp.sum(hf1 * watt_f + hb1 * watt_b, axis=1, keepdims=True) + batt
        m = jnp.maximum(a0, a1)
        e0 = jnp.exp(a0 - m)
        e1 = jnp.exp(a1 - m)
        inv = pl.reciprocal(e0 + e1, approx=True)
        xjk = (e0 * inv) * x1 + (e1 * inv) * x2                         # [N, HID]

        # --- APPNP(K=1, alpha=0) + lin1, reassociated: A @ (xjk @ Wlin) + blin ---
        z = jnp.dot(xjk.astype(bf16), w_ref[r_wlin:r_wlin + HID, 0:n_classes],
                    preferred_element_type=f32)                         # [N, C]
        logits = jnp.dot(A, z.astype(bf16), preferred_element_type=f32) + blin

        # log_softmax over classes (dim=1)
        lmax = jnp.max(logits, axis=1, keepdims=True)
        s = logits - lmax
        lse = jnp.log(jnp.sum(jnp.exp(s), axis=1, keepdims=True))
        out_ref[...] = s - lse

    return kernel


def gcn_jknet_forward(a_hat, x, p):
    N, f_in = x.shape
    n_classes = p["wlin"].shape[1]
    bf16 = jnp.bfloat16

    # ---- static row layout of the packed weight slab ----
    r_wih = 0
    r_whh = r_wih + HID
    r_w1 = r_whh + LSTM_H
    r_w2 = r_w1 + f_in
    r_wlin = r_w2 + HID
    n_rows = r_wlin + HID

    # one bf16 weight slab (lane width 256)
    wslab = jnp.zeros((n_rows, SLAB_W), jnp.float32)
    wslab = wslab.at[r_wih:r_wih + HID, 0:GATE_W].set(p["wih_f"])
    wslab = wslab.at[r_wih:r_wih + HID, GATE_W:SLAB_W].set(p["wih_b"])
    wslab = wslab.at[r_whh:r_whh + LSTM_H, 0:GATE_W].set(p["whh_f"])
    wslab = wslab.at[r_whh:r_whh + LSTM_H, GATE_W:SLAB_W].set(p["whh_b"])
    wslab = wslab.at[r_w1:r_w1 + f_in, 0:HID].set(p["w1"])
    wslab = wslab.at[r_w2:r_w2 + HID, 0:HID].set(p["w2"])
    wslab = wslab.at[r_wlin:r_wlin + HID, 0:n_classes].set(p["wlin"])
    wslab = wslab.astype(bf16)

    # one f32 bias / small-vector slab
    bslab = jnp.zeros((3, SLAB_W), jnp.float32)
    bslab = bslab.at[0:1, 0:GATE_W].set(p["bf"])
    bslab = bslab.at[0:1, GATE_W:SLAB_W].set(p["bb"])
    bslab = bslab.at[1:2, 0:HID].set(p["b1"])
    bslab = bslab.at[1:2, HID:2 * HID].set(p["b2"])
    bslab = bslab.at[1:2, 2 * HID:2 * HID + n_classes].set(p["blin"])
    bslab = bslab.at[1:2, 2 * HID + n_classes:2 * HID + n_classes + 1].set(p["batt"])
    bslab = bslab.at[2:3, 0:2 * LSTM_H].set(p["watt"])

    kernel = _make_kernel(f_in, n_classes, (r_wih, r_whh, r_w1, r_w2, r_wlin))

    vmem = pl.BlockSpec(memory_space=pltpu.MemorySpace.VMEM)
    return pl.pallas_call(
        kernel,
        out_shape=jax.ShapeDtypeStruct((N, n_classes), jnp.float32),
        in_specs=[vmem, vmem, vmem, vmem],
        out_specs=vmem,
        compiler_params=pltpu.CompilerParams(vmem_limit_bytes=64 * 1024 * 1024),
    )(a_hat.astype(bf16), x.astype(bf16), wslab, bslab)


gcn_jknet_forward = jax.jit(gcn_jknet_forward)


# ---------------- pure-JAX f32 reference (same math, no Pallas) ----------------
def gcn_jknet_reference(a_hat, x, p):
    relu = lambda v: jnp.maximum(v, 0.0)
    x1 = relu(a_hat @ (x @ p["w1"]) + p["b1"])
    x2 = relu(a_hat @ (x1 @ p["w2"]) + p["b2"])

    def cell(x_t, h, c, wih, whh, b):
        g = x_t @ wih + h @ whh + b
        i = jax.nn.sigmoid(g[:, 0:LSTM_H])
        f = jax.nn.sigmoid(g[:, LSTM_H:2 * LSTM_H])
        gg = jnp.tanh(g[:, 2 * LSTM_H:3 * LSTM_H])
        o = jax.nn.sigmoid(g[:, 3 * LSTM_H:4 * LSTM_H])
        c = f * c + i * gg
        return o * jnp.tanh(c), c

    N = x.shape[0]
    z = jnp.zeros((N, LSTM_H), jnp.float32)
    hf0, cf = cell(x1, z, z, p["wih_f"], p["whh_f"], p["bf"])
    hf1, _ = cell(x2, hf0, cf, p["wih_f"], p["whh_f"], p["bf"])
    hb1, cb = cell(x2, z, z, p["wih_b"], p["whh_b"], p["bb"])
    hb0, _ = cell(x1, hb1, cb, p["wih_b"], p["whh_b"], p["bb"])

    o0 = jnp.concatenate([hf0, hb0], axis=1)
    o1 = jnp.concatenate([hf1, hb1], axis=1)
    a0 = o0 @ p["watt"].T + p["batt"]
    a1 = o1 @ p["watt"].T + p["batt"]
    al = jax.nn.softmax(jnp.concatenate([a0, a1], axis=1), axis=1)
    xjk = al[:, 0:1] * x1 + al[:, 1:2] * x2
    xp = a_hat @ xjk
    logits = xp @ p["wlin"] + p["blin"]
    return jax.nn.log_softmax(logits, axis=1)


if __name__ == "__main__":
    N, F_IN, N_CLASSES = 64, 16, 8

    key = jax.random.PRNGKey(0)
    keys = jax.random.split(key, 16)

    # ---- deterministic synthetic graph: random undirected edges + self loops ----
    A = (jax.random.uniform(keys[0], (N, N)) < 0.1).astype(jnp.float32)
    A = jnp.maximum(A, A.T)
    A = A * (1.0 - jnp.eye(N, dtype=jnp.float32))          # zero diagonal
    A_tilde = A + jnp.eye(N, dtype=jnp.float32)            # add self loops
    deg = jnp.sum(A_tilde, axis=1)
    dinv = 1.0 / jnp.sqrt(deg)
    a_hat = dinv[:, None] * A_tilde * dinv[None, :]        # D^-1/2 (A+I) D^-1/2

    x = jax.random.normal(keys[1], (N, F_IN), jnp.float32)

    s = 0.1
    params = {
        # GCNConv1 / GCNConv2
        "w1": s * jax.random.normal(keys[2], (F_IN, HID), jnp.float32),
        "b1": s * jax.random.normal(keys[3], (1, HID), jnp.float32),
        "w2": s * jax.random.normal(keys[4], (HID, HID), jnp.float32),
        "b2": s * jax.random.normal(keys[5], (1, HID), jnp.float32),
        # JK bidirectional LSTM (input 16, hidden 32); weights stored transposed for x @ W
        "wih_f": s * jax.random.normal(keys[6], (HID, 4 * LSTM_H), jnp.float32),
        "whh_f": s * jax.random.normal(keys[7], (LSTM_H, 4 * LSTM_H), jnp.float32),
        "bf": s * jax.random.normal(keys[8], (1, 4 * LSTM_H), jnp.float32),   # b_ih + b_hh folded
        "wih_b": s * jax.random.normal(keys[9], (HID, 4 * LSTM_H), jnp.float32),
        "whh_b": s * jax.random.normal(keys[10], (LSTM_H, 4 * LSTM_H), jnp.float32),
        "bb": s * jax.random.normal(keys[11], (1, 4 * LSTM_H), jnp.float32),
        # JK attention Linear(64, 1)
        "watt": s * jax.random.normal(keys[12], (1, 2 * LSTM_H), jnp.float32),
        "batt": s * jax.random.normal(keys[13], (1, 1), jnp.float32),
        # lin1: Linear(16, num_classes) stored as [HID, C] for x @ W
        "wlin": s * jax.random.normal(keys[14], (HID, N_CLASSES), jnp.float32),
        "blin": s * jax.random.normal(keys[15], (1, N_CLASSES), jnp.float32),
    }

    out = gcn_jknet_forward(a_hat, x, params)
    out = jax.block_until_ready(out)

    ref = gcn_jknet_reference(a_hat, x, params)
    assert out.shape == (N, N_CLASSES)
    # tolerance loosened vs the f32 version: matmul operands are bf16 (f32 accumulation)
    # and sigmoid / softmax denominators use the approximate EUP reciprocal.
    assert jnp.allclose(out, ref, atol=2e-2, rtol=2e-2), "Pallas kernel mismatch vs reference"

    print("KERNEL_OK")
</pallas_src>

<mosaic_0001>
module attributes {stable_mosaic.version = 11 : i64} {
  func.func @kernel(%arg0: memref<64x64xbf16, #tpu.memory_space<vmem>>, %arg1: memref<64x16xbf16, #tpu.memory_space<vmem>>, %arg2: memref<96x256xbf16, #tpu.memory_space<vmem>>, %arg3: memref<3x256xf32, #tpu.memory_space<vmem>>, %arg4: memref<64x8xf32, #tpu.memory_space<vmem>>) attributes {dimension_semantics = [], scalar_prefetch = 0 : i64, scratch_operands = 0 : i64, tpu.core_type = #tpu.core_type<tc>} {
    %c0 = arith.constant 0 : index
    %c0_0 = arith.constant 0 : index
    %0 = vector.load %arg0[%c0, %c0_0] : memref<64x64xbf16, #tpu.memory_space<vmem>>, vector<64x64xbf16>
    %c0_1 = arith.constant 0 : index
    %c0_2 = arith.constant 0 : index
    %1 = vector.load %arg1[%c0_1, %c0_2] : memref<64x16xbf16, #tpu.memory_space<vmem>>, vector<64x16xbf16>
    %c1 = arith.constant 1 : index
    %c0_3 = arith.constant 0 : index
    %2 = vector.load %arg3[%c1, %c0_3] : memref<3x256xf32, #tpu.memory_space<vmem>>, vector<1x16xf32>
    %c1_4 = arith.constant 1 : index
    %c16 = arith.constant 16 : index
    %3 = vector.load %arg3[%c1_4, %c16] : memref<3x256xf32, #tpu.memory_space<vmem>>, vector<1x16xf32>
    %c1_5 = arith.constant 1 : index
    %c32 = arith.constant 32 : index
    %4 = vector.load %arg3[%c1_5, %c32] : memref<3x256xf32, #tpu.memory_space<vmem>>, vector<1x8xf32>
    %c1_6 = arith.constant 1 : index
    %c40 = arith.constant 40 : index
    %5 = vector.load %arg3[%c1_6, %c40] : memref<3x256xf32, #tpu.memory_space<vmem>>, vector<1x1xf32>
    %c2 = arith.constant 2 : index
    %c0_7 = arith.constant 0 : index
    %6 = vector.load %arg3[%c2, %c0_7] : memref<3x256xf32, #tpu.memory_space<vmem>>, vector<1x64xf32>
    %c0_8 = arith.constant 0 : index
    %c0_9 = arith.constant 0 : index
    %7 = vector.load %arg3[%c0_8, %c0_9] : memref<3x256xf32, #tpu.memory_space<vmem>>, vector<1x256xf32>
    %c48 = arith.constant 48 : index
    %c0_10 = arith.constant 0 : index
    %8 = vector.load %arg2[%c48, %c0_10] : memref<96x256xbf16, #tpu.memory_space<vmem>>, vector<16x16xbf16>
    %cst = arith.constant dense<0.000000e+00> : vector<64x16xf32>
    %9 = tpu.matmul %1, %8, %cst {dimension_numbers = #tpu.dot_dimension_numbers<[1], [0], [0], [1], [0, 0, 1, 1], [], []>} : vector<64x16xbf16>, vector<16x16xbf16>, vector<64x16xf32> -> vector<64x16xf32>
    %10 = arith.truncf %9 : vector<64x16xf32> to vector<64x16xbf16>
    %cst_11 = arith.constant dense<0.000000e+00> : vector<64x16xf32>
    %11 = tpu.matmul %0, %10, %cst_11 {dimension_numbers = #tpu.dot_dimension_numbers<[1], [0], [0], [1], [0, 0, 1, 1], [], []>} : vector<64x64xbf16>, vector<64x16xbf16>, vector<64x16xf32> -> vector<64x16xf32>
    %12 = vector.broadcast %2 : vector<1x16xf32> to vector<64x16xf32>
    %13 = arith.addf %11, %12 : vector<64x16xf32>
    %cst_12 = arith.constant 0.000000e+00 : f32
    %14 = vector.broadcast %cst_12 : f32 to vector<64x16xf32>
    %15 = arith.maximumf %13, %14 : vector<64x16xf32>
    %16 = arith.truncf %15 : vector<64x16xf32> to vector<64x16xbf16>
    %c64 = arith.constant 64 : index
    %c0_13 = arith.constant 0 : index
    %17 = vector.load %arg2[%c64, %c0_13] : memref<96x256xbf16, #tpu.memory_space<vmem>>, vector<16x16xbf16>
    %cst_14 = arith.constant dense<0.000000e+00> : vector<64x16xf32>
    %18 = tpu.matmul %16, %17, %cst_14 {dimension_numbers = #tpu.dot_dimension_numbers<[1], [0], [0], [1], [0, 0, 1, 1], [], []>} : vector<64x16xbf16>, vector<16x16xbf16>, vector<64x16xf32> -> vector<64x16xf32>
    %19 = arith.truncf %18 : vector<64x16xf32> to vector<64x16xbf16>
    %cst_15 = arith.constant dense<0.000000e+00> : vector<64x16xf32>
    %20 = tpu.matmul %0, %19, %cst_15 {dimension_numbers = #tpu.dot_dimension_numbers<[1], [0], [0], [1], [0, 0, 1, 1], [], []>} : vector<64x64xbf16>, vector<64x16xbf16>, vector<64x16xf32> -> vector<64x16xf32>
    %21 = vector.broadcast %3 : vector<1x16xf32> to vector<64x16xf32>
    %22 = arith.addf %20, %21 : vector<64x16xf32>
    %cst_16 = arith.constant 0.000000e+00 : f32
    %23 = vector.broadcast %cst_16 : f32 to vector<64x16xf32>
    %24 = arith.maximumf %22, %23 : vector<64x16xf32>
    %25 = arith.truncf %24 : vector<64x16xf32> to vector<64x16xbf16>
    %c0_17 = arith.constant 0 : index
    %c0_18 = arith.constant 0 : index
    %26 = vector.load %arg2[%c0_17, %c0_18] : memref<96x256xbf16, #tpu.memory_space<vmem>>, vector<16x256xbf16>
    %cst_19 = arith.constant dense<0.000000e+00> : vector<64x256xf32>
    %27 = tpu.matmul %16, %26, %cst_19 {dimension_numbers = #tpu.dot_dimension_numbers<[1], [0], [0], [1], [0, 0, 1, 1], [], []>} : vector<64x16xbf16>, vector<16x256xbf16>, vector<64x256xf32> -> vector<64x256xf32>
    %28 = vector.broadcast %7 : vector<1x256xf32> to vector<64x256xf32>
    %29 = arith.addf %27, %28 : vector<64x256xf32>
    %cst_20 = arith.constant dense<0.000000e+00> : vector<64x256xf32>
    %30 = tpu.matmul %25, %26, %cst_20 {dimension_numbers = #tpu.dot_dimension_numbers<[1], [0], [0], [1], [0, 0, 1, 1], [], []>} : vector<64x16xbf16>, vector<16x256xbf16>, vector<64x256xf32> -> vector<64x256xf32>
    %31 = vector.broadcast %7 : vector<1x256xf32> to vector<64x256xf32>
    %32 = arith.addf %30, %31 : vector<64x256xf32>
    %c16_21 = arith.constant 16 : index
    %c0_22 = arith.constant 0 : index
    %33 = vector.load %arg2[%c16_21, %c0_22] : memref<96x256xbf16, #tpu.memory_space<vmem>>, vector<32x128xbf16>
    %c16_23 = arith.constant 16 : index
    %c128 = arith.constant 128 : index
    %34 = vector.load %arg2[%c16_23, %c128] : memref<96x256xbf16, #tpu.memory_space<vmem>>, vector<32x128xbf16>
    %35 = vector.extract_strided_slice %29 {offsets = [0, 0], sizes = [64, 128], strides = [1, 1]} : vector<64x256xf32> to vector<64x128xf32>
    %36 = tpu.iota {dimensions = array<i32: 1>} : vector<64x128xi32>
    %c64_i32 = arith.constant 64 : i32
    %37 = vector.broadcast %c64_i32 : i32 to vector<64x128xi32>
    %38 = arith.cmpi sge, %36, %37 : vector<64x128xi32>
    %c96_i32 = arith.constant 96 : i32
    %39 = vector.broadcast %c96_i32 : i32 to vector<64x128xi32>
    %40 = arith.cmpi slt, %36, %39 : vector<64x128xi32>
    %41 = arith.andi %38, %40 : vector<64x128xi1>
    %cst_24 = arith.constant 0.000000e+00 : f32
    %42 = vector.broadcast %cst_24 : f32 to vector<64x128xf32>
    %43 = arith.subf %42, %35 : vector<64x128xf32>
    %44 = math.exp %43 : vector<64x128xf32>
    %cst_25 = arith.constant 1.000000e+00 : f32
    %45 = vector.broadcast %cst_25 : f32 to vector<64x128xf32>
    %46 = arith.addf %45, %44 : vector<64x128xf32>
    %47 = tpu.reciprocal %46 {approx = true} : vector<64x128xf32> -> vector<64x128xf32>
    %48 = math.tanh %35 : vector<64x128xf32>
    %49 = arith.select %41, %48, %47 : vector<64x128xi1>, vector<64x128xf32>
    %50 = vector.extract_strided_slice %49 {offsets = [0, 0], sizes = [64, 32], strides = [1, 1]} : vector<64x128xf32> to vector<64x32xf32>
    %51 = vector.extract_strided_slice %49 {offsets = [0, 64], sizes = [64, 32], strides = [1, 1]} : vector<64x128xf32> to vector<64x32xf32>
    %52 = vector.extract_strided_slice %49 {offsets = [0, 96], sizes = [64, 32], strides = [1, 1]} : vector<64x128xf32> to vector<64x32xf32>
    %53 = arith.mulf %50, %51 : vector<64x32xf32>
    %54 = math.tanh %53 : vector<64x32xf32>
    %55 = arith.mulf %52, %54 : vector<64x32xf32>
    %56 = vector.extract_strided_slice %32 {offsets = [0, 128], sizes = [64, 128], strides = [1, 1]} : vector<64x256xf32> to vector<64x128xf32>
    %57 = tpu.iota {dimensions = array<i32: 1>} : vector<64x128xi32>
    %c64_i32_26 = arith.constant 64 : i32
    %58 = vector.broadcast %c64_i32_26 : i32 to vector<64x128xi32>
    %59 = arith.cmpi sge, %57, %58 : vector<64x128xi32>
    %c96_i32_27 = arith.constant 96 : i32
    %60 = vector.broadcast %c96_i32_27 : i32 to vector<64x128xi32>
    %61 = arith.cmpi slt, %57, %60 : vector<64x128xi32>
    %62 = arith.andi %59, %61 : vector<64x128xi1>
    %cst_28 = arith.constant 0.000000e+00 : f32
    %63 = vector.broadcast %cst_28 : f32 to vector<64x128xf32>
    %64 = arith.subf %63, %56 : vector<64x128xf32>
    %65 = math.exp %64 : vector<64x128xf32>
    %cst_29 = arith.constant 1.000000e+00 : f32
    %66 = vector.broadcast %cst_29 : f32 to vector<64x128xf32>
    %67 = arith.addf %66, %65 : vector<64x128xf32>
    %68 = tpu.reciprocal %67 {approx = true} : vector<64x128xf32> -> vector<64x128xf32>
    %69 = math.tanh %56 : vector<64x128xf32>
    %70 = arith.select %62, %69, %68 : vector<64x128xi1>, vector<64x128xf32>
    %71 = vector.extract_strided_slice %70 {offsets = [0, 0], sizes = [64, 32], strides = [1, 1]} : vector<64x128xf32> to vector<64x32xf32>
    %72 = vector.extract_strided_slice %70 {offsets = [0, 64], sizes = [64, 32], strides = [1, 1]} : vector<64x128xf32> to vector<64x32xf32>
    %73 = vector.extract_strided_slice %70 {offsets = [0, 96], sizes = [64, 32], strides = [1, 1]} : vector<64x128xf32> to vector<64x32xf32>
    %74 = arith.mulf %71, %72 : vector<64x32xf32>
    %75 = math.tanh %74 : vector<64x32xf32>
    %76 = arith.mulf %73, %75 : vector<64x32xf32>
    %77 = vector.extract_strided_slice %32 {offsets = [0, 0], sizes = [64, 128], strides = [1, 1]} : vector<64x256xf32> to vector<64x128xf32>
    %78 = arith.truncf %55 : vector<64x32xf32> to vector<64x32xbf16>
    %cst_30 = arith.constant dense<0.000000e+00> : vector<64x128xf32>
    %79 = tpu.matmul %78, %33, %cst_30 {dimension_numbers = #tpu.dot_dimension_numbers<[1], [0], [0], [1], [0, 0, 1, 1], [], []>} : vector<64x32xbf16>, vector<32x128xbf16>, vector<64x128xf32> -> vector<64x128xf32>
    %80 = arith.addf %77, %79 : vector<64x128xf32>
    %81 = tpu.iota {dimensions = array<i32: 1>} : vector<64x128xi32>
    %c64_i32_31 = arith.constant 64 : i32
    %82 = vector.broadcast %c64_i32_31 : i32 to vector<64x128xi32>
    %83 = arith.cmpi sge, %81, %82 : vector<64x128xi32>
    %c96_i32_32 = arith.constant 96 : i32
    %84 = vector.broadcast %c96_i32_32 : i32 to vector<64x128xi32>
    %85 = arith.cmpi slt, %81, %84 : vector<64x128xi32>
    %86 = arith.andi %83, %85 : vector<64x128xi1>
    %cst_33 = arith.constant 0.000000e+00 : f32
    %87 = vector.broadcast %cst_33 : f32 to vector<64x128xf32>
    %88 = arith.subf %87, %80 : vector<64x128xf32>
    %89 = math.exp %88 : vector<64x128xf32>
    %cst_34 = arith.constant 1.000000e+00 : f32
    %90 = vector.broadcast %cst_34 : f32 to vector<64x128xf32>
    %91 = arith.addf %90, %89 : vector<64x128xf32>
    %92 = tpu.reciprocal %91 {approx = true} : vector<64x128xf32> -> vector<64x128xf32>
    %93 = math.tanh %80 : vector<64x128xf32>
    %94 = arith.select %86, %93, %92 : vector<64x128xi1>, vector<64x128xf32>
    %95 = vector.extract_strided_slice %94 {offsets = [0, 0], sizes = [64, 32], strides = [1, 1]} : vector<64x128xf32> to vector<64x32xf32>
    %96 = vector.extract_strided_slice %94 {offsets = [0, 32], sizes = [64, 32], strides = [1, 1]} : vector<64x128xf32> to vector<64x32xf32>
    %97 = vector.extract_strided_slice %94 {offsets = [0, 64], sizes = [64, 32], strides = [1, 1]} : vector<64x128xf32> to vector<64x32xf32>
    %98 = vector.extract_strided_slice %94 {offsets = [0, 96], sizes = [64, 32], strides = [1, 1]} : vector<64x128xf32> to vector<64x32xf32>
    %99 = arith.mulf %96, %53 : vector<64x32xf32>
    %100 = arith.mulf %95, %97 : vector<64x32xf32>
    %101 = arith.addf %99, %100 : vector<64x32xf32>
    %102 = math.tanh %101 : vector<64x32xf32>
    %103 = arith.mulf %98, %102 : vector<64x32xf32>
    %104 = vector.extract_strided_slice %29 {offsets = [0, 128], sizes = [64, 128], strides = [1, 1]} : vector<64x256xf32> to vector<64x128xf32>
    %105 = arith.truncf %76 : vector<64x32xf32> to vector<64x32xbf16>
    %cst_35 = arith.constant dense<0.000000e+00> : vector<64x128xf32>
    %106 = tpu.matmul %105, %34, %cst_35 {dimension_numbers = #tpu.dot_dimension_numbers<[1], [0], [0], [1], [0, 0, 1, 1], [], []>} : vector<64x32xbf16>, vector<32x128xbf16>, vector<64x128xf32> -> vector<64x128xf32>
    %107 = arith.addf %104, %106 : vector<64x128xf32>
    %108 = tpu.iota {dimensions = array<i32: 1>} : vector<64x128xi32>
    %c64_i32_36 = arith.constant 64 : i32
    %109 = vector.broadcast %c64_i32_36 : i32 to vector<64x128xi32>
    %110 = arith.cmpi sge, %108, %109 : vector<64x128xi32>
    %c96_i32_37 = arith.constant 96 : i32
    %111 = vector.broadcast %c96_i32_37 : i32 to vector<64x128xi32>
    %112 = arith.cmpi slt, %108, %111 : vector<64x128xi32>
    %113 = arith.andi %110, %112 : vector<64x128xi1>
    %cst_38 = arith.constant 0.000000e+00 : f32
    %114 = vector.broadcast %cst_38 : f32 to vector<64x128xf32>
    %115 = arith.subf %114, %107 : vector<64x128xf32>
    %116 = math.exp %115 : vector<64x128xf32>
    %cst_39 = arith.constant 1.000000e+00 : f32
    %117 = vector.broadcast %cst_39 : f32 to vector<64x128xf32>
    %118 = arith.addf %117, %116 : vector<64x128xf32>
    %119 = tpu.reciprocal %118 {approx = true} : vector<64x128xf32> -> vector<64x128xf32>
    %120 = math.tanh %107 : vector<64x128xf32>
    %121 = arith.select %113, %120, %119 : vector<64x128xi1>, vector<64x128xf32>
    %122 = vector.extract_strided_slice %121 {offsets = [0, 0], sizes = [64, 32], strides = [1, 1]} : vector<64x128xf32> to vector<64x32xf32>
    %123 = vector.extract_strided_slice %121 {offsets = [0, 32], sizes = [64, 32], strides = [1, 1]} : vector<64x128xf32> to vector<64x32xf32>
    %124 = vector.extract_strided_slice %121 {offsets = [0, 64], sizes = [64, 32], strides = [1, 1]} : vector<64x128xf32> to vector<64x32xf32>
    %125 = vector.extract_strided_slice %121 {offsets = [0, 96], sizes = [64, 32], strides = [1, 1]} : vector<64x128xf32> to vector<64x32xf32>
    %126 = arith.mulf %123, %74 : vector<64x32xf32>
    %127 = arith.mulf %122, %124 : vector<64x32xf32>
    %128 = arith.addf %126, %127 : vector<64x32xf32>
    %129 = math.tanh %128 : vector<64x32xf32>
    %130 = arith.mulf %125, %129 : vector<64x32xf32>
    %131 = vector.extract_strided_slice %6 {offsets = [0, 0], sizes = [1, 32], strides = [1, 1]} : vector<1x64xf32> to vector<1x32xf32>
    %132 = vector.extract_strided_slice %6 {offsets = [0, 32], sizes = [1, 32], strides = [1, 1]} : vector<1x64xf32> to vector<1x32xf32>
    %133 = vector.broadcast %131 : vector<1x32xf32> to vector<64x32xf32>
    %134 = arith.mulf %55, %133 : vector<64x32xf32>
    %135 = vector.broadcast %132 : vector<1x32xf32> to vector<64x32xf32>
    %136 = arith.mulf %130, %135 : vector<64x32xf32>
    %137 = arith.addf %134, %136 : vector<64x32xf32>
    %cst_40 = arith.constant dense<0.000000e+00> : vector<64xf32>
    %138 = vector.multi_reduction <add>, %137, %cst_40 [1] : vector<64x32xf32> to vector<64xf32>
    %139 = vector.shape_cast %138 : vector<64xf32> to vector<64x1xf32>
    %140 = vector.broadcast %5 : vector<1x1xf32> to vector<64x1xf32>
    %141 = arith.addf %139, %140 : vector<64x1xf32>
    %142 = vector.broadcast %131 : vector<1x32xf32> to vector<64x32xf32>
    %143 = arith.mulf %103, %142 : vector<64x32xf32>
    %144 = vector.broadcast %132 : vector<1x32xf32> to vector<64x32xf32>
    %145 = arith.mulf %76, %144 : vector<64x32xf32>
    %146 = arith.addf %143, %145 : vector<64x32xf32>
    %cst_41 = arith.constant dense<0.000000e+00> : vector<64xf32>
    %147 = vector.multi_reduction <add>, %146, %cst_41 [1] : vector<64x32xf32> to vector<64xf32>
    %148 = vector.shape_cast %147 : vector<64xf32> to vector<64x1xf32>
    %149 = vector.broadcast %5 : vector<1x1xf32> to vector<64x1xf32>
    %150 = arith.addf %148, %149 : vector<64x1xf32>
    %151 = arith.maximumf %141, %150 : vector<64x1xf32>
    %152 = arith.subf %141, %151 : vector<64x1xf32>
    %153 = math.exp %152 : vector<64x1xf32>
    %154 = arith.subf %150, %151 : vector<64x1xf32>
    %155 = math.exp %154 : vector<64x1xf32>
    %156 = arith.addf %153, %155 : vector<64x1xf32>
    %157 = tpu.reciprocal %156 {approx = true} : vector<64x1xf32> -> vector<64x1xf32>
    %158 = arith.mulf %153, %157 : vector<64x1xf32>
    %159 = vector.broadcast %158 : vector<64x1xf32> to vector<64x16xf32>
    %160 = arith.mulf %159, %15 : vector<64x16xf32>
    %161 = arith.mulf %155, %157 : vector<64x1xf32>
    %162 = vector.broadcast %161 : vector<64x1xf32> to vector<64x16xf32>
    %163 = arith.mulf %162, %24 : vector<64x16xf32>
    %164 = arith.addf %160, %163 : vector<64x16xf32>
    %165 = arith.truncf %164 : vector<64x16xf32> to vector<64x16xbf16>
    %c80 = arith.constant 80 : index
    %c0_42 = arith.constant 0 : index
    %166 = vector.load %arg2[%c80, %c0_42] : memref<96x256xbf16, #tpu.memory_space<vmem>>, vector<16x8xbf16>
    %cst_43 = arith.constant dense<0.000000e+00> : vector<64x8xf32>
    %167 = tpu.matmul %165, %166, %cst_43 {dimension_numbers = #tpu.dot_dimension_numbers<[1], [0], [0], [1], [0, 0, 1, 1], [], []>} : vector<64x16xbf16>, vector<16x8xbf16>, vector<64x8xf32> -> vector<64x8xf32>
    %168 = arith.truncf %167 : vector<64x8xf32> to vector<64x8xbf16>
    %cst_44 = arith.constant dense<0.000000e+00> : vector<64x8xf32>
    %169 = tpu.matmul %0, %168, %cst_44 {dimension_numbers = #tpu.dot_dimension_numbers<[1], [0], [0], [1], [0, 0, 1, 1], [], []>} : vector<64x64xbf16>, vector<64x8xbf16>, vector<64x8xf32> -> vector<64x8xf32>
    %170 = vector.broadcast %4 : vector<1x8xf32> to vector<64x8xf32>
    %171 = arith.addf %169, %170 : vector<64x8xf32>
    %cst_45 = arith.constant dense<0xFF800000> : vector<64xf32>
    %172 = vector.multi_reduction <maximumf>, %171, %cst_45 [1] : vector<64x8xf32> to vector<64xf32>
    %173 = vector.shape_cast %172 : vector<64xf32> to vector<64x1xf32>
    %174 = vector.broadcast %173 : vector<64x1xf32> to vector<64x8xf32>
    %175 = arith.subf %171, %174 : vector<64x8xf32>
    %176 = math.exp %175 : vector<64x8xf32>
    %cst_46 = arith.constant dense<0.000000e+00> : vector<64xf32>
    %177 = vector.multi_reduction <add>, %176, %cst_46 [1] : vector<64x8xf32> to vector<64xf32>
    %178 = vector.shape_cast %177 : vector<64xf32> to vector<64x1xf32>
    %179 = math.log %178 : vector<64x1xf32>
    %180 = vector.broadcast %179 : vector<64x1xf32> to vector<64x8xf32>
    %181 = arith.subf %175, %180 : vector<64x8xf32>
    %c0_47 = arith.constant 0 : index
    %c0_48 = arith.constant 0 : index
    %182 = vector.load %arg4[%c0_47, %c0_48] : memref<64x8xf32, #tpu.memory_space<vmem>>, vector<64x8xf32>
    tpu.vector_store %arg4[%c0_47, %c0_48], %181 {strides = array<i32>} : memref<64x8xf32, #tpu.memory_space<vmem>>, vector<64x8xf32>,
    return
  }
}

</mosaic_0001>

<llo_original>
// kernel: gcn_jknet_forward.1
$region0: #{gcn_jknet_forward.1}
  #allocation0 [shape = 'u32[]', space=smem, size = 0x4, offset = 0x4, fixed_abs, tag = 'smem constant byte address 0x4 - core index']
  #allocation1 [shape = 'u32[72,128]{1,0:T(1,128)}', space=vmem, size = 0x9000, scoped, tag = 'internal scratch']
  %s0 = inlined_call_operand.vmem [shape: bf16[64,64], index: 0, kind: input, shape index: {}]
  %s1 = inlined_call_operand.vmem [shape: bf16[64,16], index: 1, kind: input, shape index: {}]
  %s2 = inlined_call_operand.vmem [shape: bf16[96,256], index: 2, kind: input, shape index: {}]
  %s3 = inlined_call_operand.vmem [shape: f32[3,256], index: 3, kind: input, shape index: {}]
  %s4 = inlined_call_operand.vmem [shape: f32[64,8], index: 4, kind: output, shape index: {}]
  %s5 = sld [smem:[#allocation0]]
  $region26: #{gcn_jknet_forward.1} parent=0
    _
  %s7 = ssub.s32 1, %s5
  %s8 = scalar_select 0, %s7, %s5
  // Predicated region
  $region2: #{gcn_jknet_forward.1} parent=0 // pred_check
    _
  $region3: #{gcn_jknet_forward.1} parent=0 // pred_check_branch
    %10 = sbr.rel (0) target = $region5
  $region4: #{gcn_jknet_forward.1} parent=0 // pred_region
    _
  $region5: #{gcn_jknet_forward.1} parent=0 // pred_fallthru
    _
  // Predicated region
  $region6: #{gcn_jknet_forward.1} parent=0 // pred_check
    _
  $region7: #{gcn_jknet_forward.1} parent=0 // pred_check_branch
    %12 = sbr.rel (0) target = $region9
  $region8: #{gcn_jknet_forward.1} parent=0 // pred_region
    _
  $region9: #{gcn_jknet_forward.1} parent=0 // pred_fallthru
    _
  // Predicated region
  $region10: #{gcn_jknet_forward.1} parent=0 // pred_check
    _
  $region11: #{gcn_jknet_forward.1} parent=0 // pred_check_branch
    %14 = sbr.rel (0) target = $region13
  $region12: #{gcn_jknet_forward.1} parent=0 // pred_region
    _
  $region13: #{gcn_jknet_forward.1} parent=0 // pred_fallthru
    _
  // Predicated region
  $region14: #{gcn_jknet_forward.1} parent=0 // pred_check
    _
  $region15: #{gcn_jknet_forward.1} parent=0 // pred_check_branch
    %16 = sbr.rel (0) target = $region17
  $region16: #{gcn_jknet_forward.1} parent=0 // pred_region
    _
  $region17: #{gcn_jknet_forward.1} parent=0 // pred_fallthru
    _
  %v18 = vld [vmem:[%s0] sm:$0xf]
  %v19 = vld [vmem:[%s0 + $0x4] sm:$0xf]
  %v20 = vld [vmem:[%s0 + $0x8] sm:$0xf]
  %v21 = vld [vmem:[%s0 + $0xc] sm:$0xf]
  %v22 = vld [vmem:[%s0 + $0x10] sm:$0xf]
  %v23 = vld [vmem:[%s0 + $0x14] sm:$0xf]
  %v24 = vld [vmem:[%s0 + $0x18] sm:$0xf]
  %v25 = vld [vmem:[%s0 + $0x1c] sm:$0xf]
  %v26 = vld [vmem:[%s1] sm:$0xf]
  %v27 = vld [vmem:[%s1 + $0x4] sm:$0xf]
  %v28 = vld [vmem:[%s1 + $0x8] sm:$0xf]
  %v29 = vld [vmem:[%s1 + $0xc] sm:$0xf]
  %v30 = vld [vmem:[%s1 + $0x10] sm:$0xf]
  %v31 = vld [vmem:[%s1 + $0x14] sm:$0xf]
  %v32 = vld [vmem:[%s1 + $0x18] sm:$0xf]
  %v33 = vld [vmem:[%s1 + $0x1c] sm:$0xf]
  %v34 = vld [vmem:[%s3 + $0x1] sm:$0x1]
  %v35 = vld [vmem:[%s3 + $0x2] sm:$0x1]
  %v36 = vld [vmem:[%s3] ss:$4 sm:$0x3]
  %v37 = vld [vmem:[%s2 + $0x30] sm:$0xf]
  %v38 = vld [vmem:[%s2 + $0x38] sm:$0xf]
  %v47 = vunpack.c.l.b16 %v26
  %v48 = vunpack.c.l.b16 %v27
  %v49 = vunpack.c.l.b16 %v28
  %v50 = vunpack.c.l.b16 %v29
  %v51 = vunpack.c.l.b16 %v30
  %v52 = vunpack.c.l.b16 %v31
  %v53 = vunpack.c.l.b16 %v32
  %v54 = vunpack.c.l.b16 %v33
  %v55 = vpack.c.b16 %v48, %v47
  %v56 = vpack.c.b16 %v50, %v49
  %v57 = vpack.c.b16 %v52, %v51
  %v58 = vpack.c.b16 %v54, %v53
  %v61 = vunpack.c.l.b16 %v37
  %v62 = vunpack.c.l.b16 %v38
  %v63 = vpack.c.b16 %v62, %v61
  %vm65 = vcmask 130048
  %v67 = vsel %vm65, %v55, 0
  %v70 = vsel %vm65, %v56, 0
  %v73 = vsel %vm65, %v57, 0
  %v76 = vsel %vm65, %v58, 0
  %78 = vmatpush.bf16.msra.mxu0 0
  %79 = vmatpush.bf16.msra.mxu0 0
  %80 = vmatpush.bf16.msra.mxu0 0
  %81 = vmatpush.bf16.msra.mxu0 0
  %82 = vmatpush.bf16.msra.mxu0 0
  %83 = vmatpush.bf16.msra.mxu0 0
  %84 = vmatpush.bf16.msra.mxu0 0
  %85 = vmatpush.bf16.msra.mxu0 %v63
  %86 = vmatmul.bf16.gmra.mxu0 %v67
  %v87 = vpop.f32.mrf.mxu0
  %v88 = vadd.f32 0.0, %v87
  %v89 = vpop.f32.mrf.mxu0
  %v90 = vadd.f32 0.0, %v89
  %91 = vmatmul.bf16.gmra.mxu0 %v70
  %v92 = vpop.f32.mrf.mxu0
  %v93 = vadd.f32 0.0, %v92
  %v94 = vpop.f32.mrf.mxu0
  %v95 = vadd.f32 0.0, %v94
  %96 = vmatmul.bf16.gmra.mxu0 %v73
  %v97 = vpop.f32.mrf.mxu0
  %v98 = vadd.f32 0.0, %v97
  %v99 = vpop.f32.mrf.mxu0
  %v100 = vadd.f32 0.0, %v99
  %101 = vmatmul.bf16.gmra.mxu0 %v76
  %v102 = vpop.f32.mrf.mxu0
  %v103 = vadd.f32 0.0, %v102
  %v104 = vpop.f32.mrf.mxu0
  %v105 = vadd.f32 0.0, %v104
  %106 = vdwg.mxu0
  %v107 = vpack.c.bf16 %v90, %v88
  %v108 = vpack.c.bf16 %v95, %v93
  %v109 = vpack.c.bf16 %v100, %v98
  %v110 = vpack.c.bf16 %v105, %v103
  %v111 = vperm.slane %v34, 0
  %v120 = vunpack.c.l.b16 %v18
  %v121 = vunpack.c.l.b16 %v19
  %v122 = vunpack.c.l.b16 %v20
  %v123 = vunpack.c.l.b16 %v21
  %v124 = vunpack.c.l.b16 %v22
  %v125 = vunpack.c.l.b16 %v23
  %v126 = vunpack.c.l.b16 %v24
  %v127 = vunpack.c.l.b16 %v25
  %v128 = vpack.c.b16 %v121, %v120
  %v129 = vpack.c.b16 %v123, %v122
  %v130 = vpack.c.b16 %v125, %v124
  %v131 = vpack.c.b16 %v127, %v126
  %vm132 = vcmask 523264
  %v134 = vsel %vm132, %v128, 0
  %v137 = vsel %vm132, %v129, 0
  %v140 = vsel %vm132, %v130, 0
  %v143 = vsel %vm132, %v131, 0
  %145 = vmatpush.bf16.msra.mxu0 0
  %146 = vmatpush.bf16.msra.mxu0 0
  %147 = vmatpush.bf16.msra.mxu0 0
  %148 = vmatpush.bf16.msra.mxu0 0
  %149 = vmatpush.bf16.msra.mxu0 %v110
  %150 = vmatpush.bf16.msra.mxu0 %v109
  %151 = vmatpush.bf16.msra.mxu0 %v108
  %152 = vmatpush.bf16.msra.mxu0 %v107
  %153 = vmatmul.bf16.gmra.mxu0 %v134
  %v154 = vpop.f32.mrf.mxu0
  %v155 = vadd.f32 %v111, %v154
  %v156 = vpop.f32.mrf.mxu0
  %v157 = vadd.f32 %v111, %v156
  %158 = vmatmul.bf16.gmra.mxu0 %v137
  %v159 = vpop.f32.mrf.mxu0
  %v160 = vadd.f32 %v111, %v159
  %v161 = vpop.f32.mrf.mxu0
  %v162 = vadd.f32 %v111, %v161
  %163 = vmatmul.bf16.gmra.mxu0 %v140
  %v164 = vpop.f32.mrf.mxu0
  %v165 = vadd.f32 %v111, %v164
  %v166 = vpop.f32.mrf.mxu0
  %v167 = vadd.f32 %v111, %v166
  %168 = vmatmul.bf16.gmra.mxu0 %v143
  %v169 = vpop.f32.mrf.mxu0
  %v170 = vadd.f32 %v111, %v169
  %v171 = vpop.f32.mrf.mxu0
  %v172 = vadd.f32 %v111, %v171
  %173 = vdwg.mxu0
  %v174 = vmax.f32 %v155, 0.0
  %v175 = vmax.f32 %v157, 0.0
  %v176 = vmax.f32 %v160, 0.0
  %v177 = vmax.f32 %v162, 0.0
  %v178 = vmax.f32 %v165, 0.0
  %v179 = vmax.f32 %v167, 0.0
  %v180 = vmax.f32 %v170, 0.0
  %v181 = vmax.f32 %v172, 0.0
  %v182 = vpack.c.bf16 %v175, %v174
  %v183 = vpack.c.bf16 %v177, %v176
  %v184 = vpack.c.bf16 %v179, %v178
  %v185 = vpack.c.bf16 %v181, %v180
  %v186 = vld [vmem:[%s2 + $0x40] sm:$0xf]
  %v187 = vld [vmem:[%s2 + $0x48] sm:$0xf]
  %v190 = vunpack.c.l.b16 %v186
  %v191 = vunpack.c.l.b16 %v187
  %v192 = vpack.c.b16 %v191, %v190
  %v195 = vsel %vm65, %v182, 0
  %v198 = vsel %vm65, %v183, 0
  %v201 = vsel %vm65, %v184, 0
  %v204 = vsel %vm65, %v185, 0
  %206 = vmatpush.bf16.msra.mxu0 0
  %207 = vmatpush.bf16.msra.mxu0 0
  %208 = vmatpush.bf16.msra.mxu0 0
  %209 = vmatpush.bf16.msra.mxu0 0
  %210 = vmatpush.bf16.msra.mxu0 0
  %211 = vmatpush.bf16.msra.mxu0 0
  %212 = vmatpush.bf16.msra.mxu0 0
  %213 = vmatpush.bf16.msra.mxu0 %v192
  %214 = vmatmul.bf16.gmra.mxu0 %v195
  %v215 = vpop.f32.mrf.mxu0
  %v216 = vadd.f32 0.0, %v215
  %v217 = vpop.f32.mrf.mxu0
  %v218 = vadd.f32 0.0, %v217
  %219 = vmatmul.bf16.gmra.mxu0 %v198
  %v220 = vpop.f32.mrf.mxu0
  %v221 = vadd.f32 0.0, %v220
  %v222 = vpop.f32.mrf.mxu0
  %v223 = vadd.f32 0.0, %v222
  %224 = vmatmul.bf16.gmra.mxu0 %v201
  %v225 = vpop.f32.mrf.mxu0
  %v226 = vadd.f32 0.0, %v225
  %v227 = vpop.f32.mrf.mxu0
  %v228 = vadd.f32 0.0, %v227
  %229 = vmatmul.bf16.gmra.mxu0 %v204
  %v230 = vpop.f32.mrf.mxu0
  %v231 = vadd.f32 0.0, %v230
  %v232 = vpop.f32.mrf.mxu0
  %v233 = vadd.f32 0.0, %v232
  %234 = vdwg.mxu0
  %v235 = vpack.c.bf16 %v218, %v216
  %v236 = vpack.c.bf16 %v223, %v221
  %v237 = vpack.c.bf16 %v228, %v226
  %v238 = vpack.c.bf16 %v233, %v231
  %240 = vrot.lane.b32.xlu0 %v111, 112
  %v241 = vpop.permute.xlu0 %240
  %243 = vmatpush.bf16.msra.mxu0 0
  %244 = vmatpush.bf16.msra.mxu0 0
  %245 = vmatpush.bf16.msra.mxu0 0
  %246 = vmatpush.bf16.msra.mxu0 0
  %247 = vmatpush.bf16.msra.mxu0 %v238
  %248 = vmatpush.bf16.msra.mxu0 %v237
  %249 = vmatpush.bf16.msra.mxu0 %v236
  %250 = vmatpush.bf16.msra.mxu0 %v235
  %251 = vmatmul.bf16.gmra.mxu0 %v134
  %v252 = vpop.f32.mrf.mxu0
  %v253 = vadd.f32 %v241, %v252
  %v254 = vpop.f32.mrf.mxu0
  %v255 = vadd.f32 %v241, %v254
  %256 = vmatmul.bf16.gmra.mxu0 %v137
  %v257 = vpop.f32.mrf.mxu0
  %v258 = vadd.f32 %v241, %v257
  %v259 = vpop.f32.mrf.mxu0
  %v260 = vadd.f32 %v241, %v259
  %261 = vmatmul.bf16.gmra.mxu0 %v140
  %v262 = vpop.f32.mrf.mxu0
  %v263 = vadd.f32 %v241, %v262
  %v264 = vpop.f32.mrf.mxu0
  %v265 = vadd.f32 %v241, %v264
  %266 = vmatmul.bf16.gmra.mxu0 %v143
  %v267 = vpop.f32.mrf.mxu0
  %v268 = vadd.f32 %v241, %v267
  %v269 = vpop.f32.mrf.mxu0
  %v270 = vadd.f32 %v241, %v269
  %271 = vdwg.mxu0
  %v272 = vmax.f32 %v253, 0.0
  %v273 = vmax.f32 %v255, 0.0
  %v274 = vmax.f32 %v258, 0.0
  %v275 = vmax.f32 %v260, 0.0
  %v276 = vmax.f32 %v263, 0.0
  %v277 = vmax.f32 %v265, 0.0
  %v278 = vmax.f32 %v268, 0.0
  %v279 = vmax.f32 %v270, 0.0
  %v280 = vpack.c.bf16 %v273, %v272
  %v281 = vpack.c.bf16 %v275, %v274
  %v282 = vpack.c.bf16 %v277, %v276
  %v283 = vpack.c.bf16 %v279, %v278
  %v284 = vld [vmem:[%s2] sm:$0xff]
  %v285 = vld [vmem:[%s2 + $0x8] sm:$0xff]
  %v287 = vperm.slane %v36, 0
  %v288 = vperm.slane %v36, 1
  %v293 = vunpack.c.l.b16 %v284
  %v294 = vunpack.c.h.b16 %v284
  %v295 = vunpack.c.l.b16 %v285
  %v296 = vunpack.c.h.b16 %v285
  %v297 = vpack.c.b16 %v295, %v293
  %v298 = vpack.c.b16 %v296, %v294
  %301 = vmatpush.bf16.msra.mxu0 0
  %302 = vmatpush.bf16.msra.mxu0 0
  %303 = vmatpush.bf16.msra.mxu0 0
  %304 = vmatpush.bf16.msra.mxu0 0
  %305 = vmatpush.bf16.msra.mxu0 0
  %306 = vmatpush.bf16.msra.mxu0 0
  %307 = vmatpush.bf16.msra.mxu0 0
  %308 = vmatpush.bf16.msra.mxu0 %v297
  %309 = vmatmul.bf16.gmra.mxu0 %v195
  %v310 = vpop.f32.mrf.mxu0
  %v311 = vadd.f32 %v287, %v310
  %v312 = vpop.f32.mrf.mxu0
  %v313 = vadd.f32 %v287, %v312
  %314 = vmatmul.bf16.gmra.mxu0 %v198
  %v315 = vpop.f32.mrf.mxu0
  %v316 = vadd.f32 %v287, %v315
  %v317 = vpop.f32.mrf.mxu0
  %v318 = vadd.f32 %v287, %v317
  %319 = vmatmul.bf16.gmra.mxu0 %v201
  %v320 = vpop.f32.mrf.mxu0
  %v321 = vadd.f32 %v287, %v320
  %v322 = vpop.f32.mrf.mxu0
  %v323 = vadd.f32 %v287, %v322
  %324 = vmatmul.bf16.gmra.mxu0 %v204
  %v325 = vpop.f32.mrf.mxu0
  %v326 = vadd.f32 %v287, %v325
  %v327 = vpop.f32.mrf.mxu0
  %v328 = vadd.f32 %v287, %v327
  %329 = vdwg.mxu0
  %330 = vmatpush.bf16.msra.mxu0 0
  %331 = vmatpush.bf16.msra.mxu0 0
  %332 = vmatpush.bf16.msra.mxu0 0
  %333 = vmatpush.bf16.msra.mxu0 0
  %334 = vmatpush.bf16.msra.mxu0 0
  %335 = vmatpush.bf16.msra.mxu0 0
  %336 = vmatpush.bf16.msra.mxu0 0
  %337 = vmatpush.bf16.msra.mxu0 %v298
  %338 = vmatmul.bf16.gmra.mxu0 %v195
  %v339 = vpop.f32.mrf.mxu0
  %v340 = vadd.f32 %v288, %v339
  %v341 = vpop.f32.mrf.mxu0
  %v342 = vadd.f32 %v288, %v341
  %343 = vmatmul.bf16.gmra.mxu0 %v198
  %v344 = vpop.f32.mrf.mxu0
  %v345 = vadd.f32 %v288, %v344
  %v346 = vpop.f32.mrf.mxu0
  %v347 = vadd.f32 %v288, %v346
  %348 = vmatmul.bf16.gmra.mxu0 %v201
  %v349 = vpop.f32.mrf.mxu0
  %v350 = vadd.f32 %v288, %v349
  %v351 = vpop.f32.mrf.mxu0
  %v352 = vadd.f32 %v288, %v351
  %353 = vmatmul.bf16.gmra.mxu0 %v204
  %v354 = vpop.f32.mrf.mxu0
  %v355 = vadd.f32 %v288, %v354
  %v356 = vpop.f32.mrf.mxu0
  %v357 = vadd.f32 %v288, %v356
  %358 = vdwg.mxu0
  %v360 = vsel %vm65, %v280, 0
  %v363 = vsel %vm65, %v281, 0
  %v366 = vsel %vm65, %v282, 0
  %v369 = vsel %vm65, %v283, 0
  %371 = vmatpush.bf16.msra.mxu0 0
  %372 = vmatpush.bf16.msra.mxu0 0
  %373 = vmatpush.bf16.msra.mxu0 0
  %374 = vmatpush.bf16.msra.mxu0 0
  %375 = vmatpush.bf16.msra.mxu0 0
  %376 = vmatpush.bf16.msra.mxu0 0
  %377 = vmatpush.bf16.msra.mxu0 0
  %378 = vmatpush.bf16.msra.mxu0 %v297
  %379 = vmatmul.bf16.gmra.mxu0 %v360
  %v380 = vpop.f32.mrf.mxu0
  %v381 = vadd.f32 %v287, %v380
  %v382 = vpop.f32.mrf.mxu0
  %v383 = vadd.f32 %v287, %v382
  %384 = vmatmul.bf16.gmra.mxu0 %v363
  %v385 = vpop.f32.mrf.mxu0
  %v386 = vadd.f32 %v287, %v385
  %v387 = vpop.f32.mrf.mxu0
  %v388 = vadd.f32 %v287, %v387
  %389 = vmatmul.bf16.gmra.mxu0 %v366
  %v390 = vpop.f32.mrf.mxu0
  %v391 = vadd.f32 %v287, %v390
  %v392 = vpop.f32.mrf.mxu0
  %v393 = vadd.f32 %v287, %v392
  %394 = vmatmul.bf16.gmra.mxu0 %v369
  %v395 = vpop.f32.mrf.mxu0
  %v396 = vadd.f32 %v287, %v395
  %v397 = vpop.f32.mrf.mxu0
  %v398 = vadd.f32 %v287, %v397
  %399 = vdwg.mxu0
  %400 = vmatpush.bf16.msra.mxu0 0
  %401 = vmatpush.bf16.msra.mxu0 0
  %402 = vmatpush.bf16.msra.mxu0 0
  %403 = vmatpush.bf16.msra.mxu0 0
  %404 = vmatpush.bf16.msra.mxu0 0
  %405 = vmatpush.bf16.msra.mxu0 0
  %406 = vmatpush.bf16.msra.mxu0 0
  %407 = vmatpush.bf16.msra.mxu0 %v298
  %408 = vmatmul.bf16.gmra.mxu0 %v360
  %v409 = vpop.f32.mrf.mxu0
  %v410 = vadd.f32 %v288, %v409
  %v411 = vpop.f32.mrf.mxu0
  %v412 = vadd.f32 %v288, %v411
  %413 = vmatmul.bf16.gmra.mxu0 %v363
  %v414 = vpop.f32.mrf.mxu0
  %v415 = vadd.f32 %v288, %v414
  %v416 = vpop.f32.mrf.mxu0
  %v417 = vadd.f32 %v288, %v416
  %418 = vmatmul.bf16.gmra.mxu0 %v366
  %v419 = vpop.f32.mrf.mxu0
  %v420 = vadd.f32 %v288, %v419
  %v421 = vpop.f32.mrf.mxu0
  %v422 = vadd.f32 %v288, %v421
  %423 = vmatmul.bf16.gmra.mxu0 %v369
  %v424 = vpop.f32.mrf.mxu0
  %v425 = vadd.f32 %v288, %v424
  %v426 = vpop.f32.mrf.mxu0
  %v427 = vadd.f32 %v288, %v426
  %428 = vdwg.mxu0
  %v429 = vld [vmem:[%s2 + $0x10] sm:$0xf]
  %v430 = vld [vmem:[%s2 + $0x18] sm:$0xf]
  %v431 = vld [vmem:[%s2 + $0x20] sm:$0xf]
  %v432 = vld [vmem:[%s2 + $0x28] sm:$0xf]
  %v433 = vld [vmem:[%s2 + $0x14] sm:$0xf]
  %v434 = vld [vmem:[%s2 + $0x1c] sm:$0xf]
  %v435 = vld [vmem:[%s2 + $0x24] sm:$0xf]
  %v436 = vld [vmem:[%s2 + $0x2c] sm:$0xf]
  %v437 = vlaneseq
  %v438 = vand.u32 %v437, 127
  %vm439 = vcmp.ge.s32.totalorder %v438, 64
  %vm440 = vcmp.lt.s32.totalorder %v438, 96
  %vm441 = vmand %vm439, %vm440
  %v442 = vsub.f32 0.0, %v311
  %v443 = vsub.f32 0.0, %v313
  %v444 = vsub.f32 0.0, %v316
  %v445 = vsub.f32 0.0, %v318
  %v446 = vsub.f32 0.0, %v321
  %v447 = vsub.f32 0.0, %v323
  %v448 = vsub.f32 0.0, %v326
  %v449 = vsub.f32 0.0, %v328
  %v450 = vmul.f32 %v442, 1.442695
  %v451 = vpow.pop %v450
  %v452 = vmul.f32 %v443, 1.442695
  %v453 = vpow.pop %v452
  %v454 = vmul.f32 %v444, 1.442695
  %v455 = vpow.pop %v454
  %v456 = vmul.f32 %v445, 1.442695
  %v457 = vpow.pop %v456
  %v458 = vmul.f32 %v446, 1.442695
  %v459 = vpow.pop %v458
  %v460 = vmul.f32 %v447, 1.442695
  %v461 = vpow.pop %v460
  %v462 = vmul.f32 %v448, 1.442695
  %v463 = vpow.pop %v462
  %v464 = vmul.f32 %v449, 1.442695
  %v465 = vpow.pop %v464
  %v466 = vadd.f32 %v451, 1.0
  %v467 = vadd.f32 %v453, 1.0
  %v468 = vadd.f32 %v455, 1.0
  %v469 = vadd.f32 %v457, 1.0
  %v470 = vadd.f32 %v459, 1.0
  %v471 = vadd.f32 %v461, 1.0
  %v472 = vadd.f32 %v463, 1.0
  %v473 = vadd.f32 %v465, 1.0
  %v474 = vrcp.pop %v466
  %v475 = vrcp.pop %v467
  %v476 = vrcp.pop %v468
  %v477 = vrcp.pop %v469
  %v478 = vrcp.pop %v470
  %v479 = vrcp.pop %v471
  %v480 = vrcp.pop %v472
  %v481 = vrcp.pop %v473
  %v482 = vtanh.pop %v311
  %v483 = vtanh.pop %v313
  %v484 = vtanh.pop %v316
  %v485 = vtanh.pop %v318
  %v486 = vtanh.pop %v321
  %v487 = vtanh.pop %v323
  %v488 = vtanh.pop %v326
  %v489 = vtanh.pop %v328
  %v490 = vsel %vm441, %v482, %v474
  %v491 = vsel %vm441, %v483, %v475
  %v492 = vsel %vm441, %v484, %v476
  %v493 = vsel %vm441, %v485, %v477
  %v494 = vsel %vm441, %v486, %v478
  %v495 = vsel %vm441, %v487, %v479
  %v496 = vsel %vm441, %v488, %v480
  %v497 = vsel %vm441, %v489, %v481
  %506 = vrot.lane.b32.xlu0 %v490, 64
  %v507 = vpop.permute.xlu0 %506
  %508 = vrot.lane.b32.xlu0 %v491, 64
  %v509 = vpop.permute.xlu0 %508
  %510 = vrot.lane.b32.xlu0 %v492, 64
  %v511 = vpop.permute.xlu0 %510
  %512 = vrot.lane.b32.xlu0 %v493, 64
  %v513 = vpop.permute.xlu0 %512
  %514 = vrot.lane.b32.xlu0 %v494, 64
  %v515 = vpop.permute.xlu0 %514
  %516 = vrot.lane.b32.xlu0 %v495, 64
  %v517 = vpop.permute.xlu0 %516
  %518 = vrot.lane.b32.xlu0 %v496, 64
  %v519 = vpop.permute.xlu0 %518
  %520 = vrot.lane.b32.xlu0 %v497, 64
  %v521 = vpop.permute.xlu0 %520
  %v530 = vmul.f32 %v490, %v507
  %v531 = vmul.f32 %v491, %v509
  %v532 = vmul.f32 %v492, %v511
  %v533 = vmul.f32 %v493, %v513
  %v534 = vmul.f32 %v494, %v515
  %v535 = vmul.f32 %v495, %v517
  %v536 = vmul.f32 %v496, %v519
  %v537 = vmul.f32 %v497, %v521
  %v538 = vtanh.pop %v530
  %v539 = vtanh.pop %v531
  %v540 = vtanh.pop %v532
  %v541 = vtanh.pop %v533
  %v542 = vtanh.pop %v534
  %v543 = vtanh.pop %v535
  %v544 = vtanh.pop %v536
  %v545 = vtanh.pop %v537
  %554 = vrot.lane.b32.xlu0 %v538, 96
  %v555 = vpop.permute.xlu0 %554
  %556 = vrot.lane.b32.xlu0 %v539, 96
  %v557 = vpop.permute.xlu0 %556
  %558 = vrot.lane.b32.xlu0 %v540, 96
  %v559 = vpop.permute.xlu0 %558
  %560 = vrot.lane.b32.xlu0 %v541, 96
  %v561 = vpop.permute.xlu0 %560
  %562 = vrot.lane.b32.xlu0 %v542, 96
  %v563 = vpop.permute.xlu0 %562
  %564 = vrot.lane.b32.xlu0 %v543, 96
  %v565 = vpop.permute.xlu0 %564
  %566 = vrot.lane.b32.xlu0 %v544, 96
  %v567 = vpop.permute.xlu0 %566
  %568 = vrot.lane.b32.xlu0 %v545, 96
  %v569 = vpop.permute.xlu0 %568
  %v578 = vmul.f32 %v490, %v555
  %v579 = vmul.f32 %v491, %v557
  %v580 = vmul.f32 %v492, %v559
  %v581 = vmul.f32 %v493, %v561
  %v582 = vmul.f32 %v494, %v563
  %v583 = vmul.f32 %v495, %v565
  %v584 = vmul.f32 %v496, %v567
  %v585 = vmul.f32 %v497, %v569
  %v586 = vsub.f32 0.0, %v410
  %v587 = vsub.f32 0.0, %v412
  %v588 = vsub.f32 0.0, %v415
  %v589 = vsub.f32 0.0, %v417
  %v590 = vsub.f32 0.0, %v420
  %v591 = vsub.f32 0.0, %v422
  %v592 = vsub.f32 0.0, %v425
  %v593 = vsub.f32 0.0, %v427
  %v594 = vmul.f32 %v586, 1.442695
  %v595 = vpow.pop %v594
  %v596 = vmul.f32 %v587, 1.442695
  %v597 = vpow.pop %v596
  %v598 = vmul.f32 %v588, 1.442695
  %v599 = vpow.pop %v598
  %v600 = vmul.f32 %v589, 1.442695
  %v601 = vpow.pop %v600
  %v602 = vmul.f32 %v590, 1.442695
  %v603 = vpow.pop %v602
  %v604 = vmul.f32 %v591, 1.442695
  %v605 = vpow.pop %v604
  %v606 = vmul.f32 %v592, 1.442695
  %v607 = vpow.pop %v606
  %v608 = vmul.f32 %v593, 1.442695
  %v609 = vpow.pop %v608
  %v610 = vadd.f32 %v595, 1.0
  %v611 = vadd.f32 %v597, 1.0
  %v612 = vadd.f32 %v599, 1.0
  %v613 = vadd.f32 %v601, 1.0
  %v614 = vadd.f32 %v603, 1.0
  %v615 = vadd.f32 %v605, 1.0
  %v616 = vadd.f32 %v607, 1.0
  %v617 = vadd.f32 %v609, 1.0
  %v618 = vrcp.pop %v610
  %v619 = vrcp.pop %v611
  %v620 = vrcp.pop %v612
  %v621 = vrcp.pop %v613
  %v622 = vrcp.pop %v614
  %v623 = vrcp.pop %v615
  %v624 = vrcp.pop %v616
  %v625 = vrcp.pop %v617
  %v626 = vtanh.pop %v410
  %v627 = vtanh.pop %v412
  %v628 = vtanh.pop %v415
  %v629 = vtanh.pop %v417
  %v630 = vtanh.pop %v420
  %v631 = vtanh.pop %v422
  %v632 = vtanh.pop %v425
  %v633 = vtanh.pop %v427
  %v634 = vsel %vm441, %v626, %v618
  %v635 = vsel %vm441, %v627, %v619
  %v636 = vsel %vm441, %v628, %v620
  %v637 = vsel %vm441, %v629, %v621
  %v638 = vsel %vm441, %v630, %v622
  %v639 = vsel %vm441, %v631, %v623
  %v640 = vsel %vm441, %v632, %v624
  %v641 = vsel %vm441, %v633, %v625
  %650 = vrot.lane.b32.xlu0 %v634, 64
  %v651 = vpop.permute.xlu0 %650
  %652 = vrot.lane.b32.xlu0 %v635, 64
  %v653 = vpop.permute.xlu0 %652
  %654 = vrot.lane.b32.xlu0 %v636, 64
  %v655 = vpop.permute.xlu0 %654
  %656 = vrot.lane.b32.xlu0 %v637, 64
  %v657 = vpop.permute.xlu0 %656
  %658 = vrot.lane.b32.xlu0 %v638, 64
  %v659 = vpop.permute.xlu0 %658
  %660 = vrot.lane.b32.xlu0 %v639, 64
  %v661 = vpop.permute.xlu0 %660
  %662 = vrot.lane.b32.xlu0 %v640, 64
  %v663 = vpop.permute.xlu0 %662
  %664 = vrot.lane.b32.xlu0 %v641, 64
  %v665 = vpop.permute.xlu0 %664
  %v674 = vmul.f32 %v634, %v651
  %v675 = vmul.f32 %v635, %v653
  %v676 = vmul.f32 %v636, %v655
  %v677 = vmul.f32 %v637, %v657
  %v678 = vmul.f32 %v638, %v659
  %v679 = vmul.f32 %v639, %v661
  %v680 = vmul.f32 %v640, %v663
  %v681 = vmul.f32 %v641, %v665
  %v682 = vtanh.pop %v674
  %v683 = vtanh.pop %v675
  %v684 = vtanh.pop %v676
  %v685 = vtanh.pop %v677
  %v686 = vtanh.pop %v678
  %v687 = vtanh.pop %v679
  %v688 = vtanh.pop %v680
  %v689 = vtanh.pop %v681
  %698 = vrot.lane.b32.xlu0 %v682, 96
  %v699 = vpop.permute.xlu0 %698
  %700 = vrot.lane.b32.xlu0 %v683, 96
  %v701 = vpop.permute.xlu0 %700
  %702 = vrot.lane.b32.xlu0 %v684, 96
  %v703 = vpop.permute.xlu0 %702
  %704 = vrot.lane.b32.xlu0 %v685, 96
  %v705 = vpop.permute.xlu0 %704
  %706 = vrot.lane.b32.xlu0 %v686, 96
  %v707 = vpop.permute.xlu0 %706
  %708 = vrot.lane.b32.xlu0 %v687, 96
  %v709 = vpop.permute.xlu0 %708
  %710 = vrot.lane.b32.xlu0 %v688, 96
  %v711 = vpop.permute.xlu0 %710
  %712 = vrot.lane.b32.xlu0 %v689, 96
  %v713 = vpop.permute.xlu0 %712
  %v722 = vmul.f32 %v634, %v699
  %v723 = vmul.f32 %v635, %v701
  %v724 = vmul.f32 %v636, %v703
  %v725 = vmul.f32 %v637, %v705
  %v726 = vmul.f32 %v638, %v707
  %v727 = vmul.f32 %v639, %v709
  %v728 = vmul.f32 %v640, %v711
  %v729 = vmul.f32 %v641, %v713
  %v730 = vpack.c.bf16 %v579, %v578
  %v731 = vpack.c.bf16 %v581, %v580
  %v732 = vpack.c.bf16 %v583, %v582
  %v733 = vpack.c.bf16 %v585, %v584
  %738 = vrot.lane.b32.xlu0 %v730, 32
  %v739 = vpop.permute.xlu0 %738
  %740 = vrot.lane.b32.xlu0 %v731, 32
  %v741 = vpop.permute.xlu0 %740
  %742 = vrot.lane.b32.xlu0 %v732, 32
  %v743 = vpop.permute.xlu0 %742
  %744 = vrot.lane.b32.xlu0 %v733, 32
  %v745 = vpop.permute.xlu0 %744
  %v750 = vunpack.c.l.b16 %v429
  %v751 = vunpack.c.l.b16 %v430
  %v752 = vunpack.c.l.b16 %v431
  %v753 = vunpack.c.l.b16 %v432
  %v754 = vpack.c.b16 %v751, %v750
  %v755 = vpack.c.b16 %v753, %v752
  %vm758 = vcmask 261120
  %v760 = vsel %vm758, %v739, 0
  %v763 = vsel %vm758, %v741, 0
  %v766 = vsel %vm758, %v743, 0
  %v769 = vsel %vm758, %v745, 0
  %771 = vmatpush.bf16.msra.mxu0 0
  %772 = vmatpush.bf16.msra.mxu0 0
  %773 = vmatpush.bf16.msra.mxu0 0
  %774 = vmatpush.bf16.msra.mxu0 0
  %775 = vmatpush.bf16.msra.mxu0 0
  %776 = vmatpush.bf16.msra.mxu0 0
  %777 = vmatpush.bf16.msra.mxu0 %v755
  %778 = vmatpush.bf16.msra.mxu0 %v754
  %779 = vmatmul.bf16.gmra.mxu0 %v760
  %v780 = vpop.f32.mrf.mxu0
  %v781 = vadd.f32 0.0, %v780
  %v782 = vpop.f32.mrf.mxu0
  %v783 = vadd.f32 0.0, %v782
  %784 = vmatmul.bf16.gmra.mxu0 %v763
  %v785 = vpop.f32.mrf.mxu0
  %v786 = vadd.f32 0.0, %v785
  %v787 = vpop.f32.mrf.mxu0
  %v788 = vadd.f32 0.0, %v787
  %789 = vmatmul.bf16.gmra.mxu0 %v766
  %v790 = vpop.f32.mrf.mxu0
  %v791 = vadd.f32 0.0, %v790
  %v792 = vpop.f32.mrf.mxu0
  %v793 = vadd.f32 0.0, %v792
  %794 = vmatmul.bf16.gmra.mxu0 %v769
  %v795 = vpop.f32.mrf.mxu0
  %v796 = vadd.f32 0.0, %v795
  %v797 = vpop.f32.mrf.mxu0
  %v798 = vadd.f32 0.0, %v797
  %799 = vdwg.mxu0
  %v800 = vadd.f32 %v381, %v781
  %v801 = vadd.f32 %v383, %v783
  %v802 = vadd.f32 %v386, %v786
  %v803 = vadd.f32 %v388, %v788
  %v804 = vadd.f32 %v391, %v791
  %v805 = vadd.f32 %v393, %v793
  %v806 = vadd.f32 %v396, %v796
  %v807 = vadd.f32 %v398, %v798
  %v808 = vsub.f32 0.0, %v800
  %v809 = vsub.f32 0.0, %v801
  %v810 = vsub.f32 0.0, %v802
  %v811 = vsub.f32 0.0, %v803
  %v812 = vsub.f32 0.0, %v804
  %v813 = vsub.f32 0.0, %v805
  %v814 = vsub.f32 0.0, %v806
  %v815 = vsub.f32 0.0, %v807
  %v816 = vmul.f32 %v808, 1.442695
  %v817 = vpow.pop %v816
  %v818 = vmul.f32 %v809, 1.442695
  %v819 = vpow.pop %v818
  %v820 = vmul.f32 %v810, 1.442695
  %v821 = vpow.pop %v820
  %v822 = vmul.f32 %v811, 1.442695
  %v823 = vpow.pop %v822
  %v824 = vmul.f32 %v812, 1.442695
  %v825 = vpow.pop %v824
  %v826 = vmul.f32 %v813, 1.442695
  %v827 = vpow.pop %v826
  %v828 = vmul.f32 %v814, 1.442695
  %v829 = vpow.pop %v828
  %v830 = vmul.f32 %v815, 1.442695
  %v831 = vpow.pop %v830
  %v832 = vadd.f32 %v817, 1.0
  %v833 = vadd.f32 %v819, 1.0
  %v834 = vadd.f32 %v821, 1.0
  %v835 = vadd.f32 %v823, 1.0
  %v836 = vadd.f32 %v825, 1.0
  %v837 = vadd.f32 %v827, 1.0
  %v838 = vadd.f32 %v829, 1.0
  %v839 = vadd.f32 %v831, 1.0
  %v840 = vrcp.pop %v832
  %v841 = vrcp.pop %v833
  %v842 = vrcp.pop %v834
  %v843 = vrcp.pop %v835
  %v844 = vrcp.pop %v836
  %v845 = vrcp.pop %v837
  %v846 = vrcp.pop %v838
  %v847 = vrcp.pop %v839
  %v848 = vtanh.pop %v800
  %v849 = vtanh.pop %v801
  %v850 = vtanh.pop %v802
  %v851 = vtanh.pop %v803
  %v852 = vtanh.pop %v804
  %v853 = vtanh.pop %v805
  %v854 = vtanh.pop %v806
  %v855 = vtanh.pop %v807
  %v856 = vsel %vm441, %v848, %v840
  %v857 = vsel %vm441, %v849, %v841
  %v858 = vsel %vm441, %v850, %v842
  %v859 = vsel %vm441, %v851, %v843
  %v860 = vsel %vm441, %v852, %v844
  %v861 = vsel %vm441, %v853, %v845
  %v862 = vsel %vm441, %v854, %v846
  %v863 = vsel %vm441, %v855, %v847
  %872 = vrot.lane.b32.xlu0 %v530, 32
  %v873 = vpop.permute.xlu0 %872
  %874 = vrot.lane.b32.xlu0 %v531, 32
  %v875 = vpop.permute.xlu0 %874
  %876 = vrot.lane.b32.xlu0 %v532, 32
  %v877 = vpop.permute.xlu0 %876
  %878 = vrot.lane.b32.xlu0 %v533, 32
  %v879 = vpop.permute.xlu0 %878
  %880 = vrot.lane.b32.xlu0 %v534, 32
  %v881 = vpop.permute.xlu0 %880
  %882 = vrot.lane.b32.xlu0 %v535, 32
  %v883 = vpop.permute.xlu0 %882
  %884 = vrot.lane.b32.xlu0 %v536, 32
  %v885 = vpop.permute.xlu0 %884
  %886 = vrot.lane.b32.xlu0 %v537, 32
  %v887 = vpop.permute.xlu0 %886
  %v896 = vmul.f32 %v856, %v873
  %v897 = vmul.f32 %v857, %v875
  %v898 = vmul.f32 %v858, %v877
  %v899 = vmul.f32 %v859, %v879
  %v900 = vmul.f32 %v860, %v881
  %v901 = vmul.f32 %v861, %v883
  %v902 = vmul.f32 %v862, %v885
  %v903 = vmul.f32 %v863, %v887
  %912 = vrot.lane.b32.xlu0 %v856, 64
  %v913 = vpop.permute.xlu0 %912
  %914 = vrot.lane.b32.xlu0 %v857, 64
  %v915 = vpop.permute.xlu0 %914
  %916 = vrot.lane.b32.xlu0 %v858, 64
  %v917 = vpop.permute.xlu0 %916
  %918 = vrot.lane.b32.xlu0 %v859, 64
  %v919 = vpop.permute.xlu0 %918
  %920 = vrot.lane.b32.xlu0 %v860, 64
  %v921 = vpop.permute.xlu0 %920
  %922 = vrot.lane.b32.xlu0 %v861, 64
  %v923 = vpop.permute.xlu0 %922
  %924 = vrot.lane.b32.xlu0 %v862, 64
  %v925 = vpop.permute.xlu0 %924
  %926 = vrot.lane.b32.xlu0 %v863, 64
  %v927 = vpop.permute.xlu0 %926
  %v936 = vmul.f32 %v856, %v913
  %v937 = vmul.f32 %v857, %v915
  %v938 = vmul.f32 %v858, %v917
  %v939 = vmul.f32 %v859, %v919
  %v940 = vmul.f32 %v860, %v921
  %v941 = vmul.f32 %v861, %v923
  %v942 = vmul.f32 %v862, %v925
  %v943 = vmul.f32 %v863, %v927
  %952 = vrot.lane.b32.xlu0 %v936, 32
  %v953 = vpop.permute.xlu0 %952
  %954 = vrot.lane.b32.xlu0 %v937, 32
  %v955 = vpop.permute.xlu0 %954
  %956 = vrot.lane.b32.xlu0 %v938, 32
  %v957 = vpop.permute.xlu0 %956
  %958 = vrot.lane.b32.xlu0 %v939, 32
  %v959 = vpop.permute.xlu0 %958
  %960 = vrot.lane.b32.xlu0 %v940, 32
  %v961 = vpop.permute.xlu0 %960
  %962 = vrot.lane.b32.xlu0 %v941, 32
  %v963 = vpop.permute.xlu0 %962
  %964 = vrot.lane.b32.xlu0 %v942, 32
  %v965 = vpop.permute.xlu0 %964
  %966 = vrot.lane.b32.xlu0 %v943, 32
  %v967 = vpop.permute.xlu0 %966
  %v976 = vadd.f32 %v896, %v953
  %v977 = vadd.f32 %v897, %v955
  %v978 = vadd.f32 %v898, %v957
  %v979 = vadd.f32 %v899, %v959
  %v980 = vadd.f32 %v900, %v961
  %v981 = vadd.f32 %v901, %v963
  %v982 = vadd.f32 %v902, %v965
  %v983 = vadd.f32 %v903, %v967
  %v984 = vtanh.pop %v976
  %v985 = vtanh.pop %v977
  %v986 = vtanh.pop %v978
  %v987 = vtanh.pop %v979
  %v988 = vtanh.pop %v980
  %v989 = vtanh.pop %v981
  %v990 = vtanh.pop %v982
  %v991 = vtanh.pop %v983
  %1000 = vrot.lane.b32.xlu0 %v984, 64
  %v1001 = vpop.permute.xlu0 %1000
  %1002 = vrot.lane.b32.xlu0 %v985, 64
  %v1003 = vpop.permute.xlu0 %1002
  %1004 = vrot.lane.b32.xlu0 %v986, 64
  %v1005 = vpop.permute.xlu0 %1004
  %1006 = vrot.lane.b32.xlu0 %v987, 64
  %v1007 = vpop.permute.xlu0 %1006
  %1008 = vrot.lane.b32.xlu0 %v988, 64
  %v1009 = vpop.permute.xlu0 %1008
  %1010 = vrot.lane.b32.xlu0 %v989, 64
  %v1011 = vpop.permute.xlu0 %1010
  %1012 = vrot.lane.b32.xlu0 %v990, 64
  %v1013 = vpop.permute.xlu0 %1012
  %1014 = vrot.lane.b32.xlu0 %v991, 64
  %v1015 = vpop.permute.xlu0 %1014
  %v1024 = vmul.f32 %v856, %v1001
  %v1025 = vmul.f32 %v857, %v1003
  %v1026 = vmul.f32 %v858, %v1005
  %v1027 = vmul.f32 %v859, %v1007
  %v1028 = vmul.f32 %v860, %v1009
  %v1029 = vmul.f32 %v861, %v1011
  %v1030 = vmul.f32 %v862, %v1013
  %v1031 = vmul.f32 %v863, %v1015
  %v1032 = vpack.c.bf16 %v723, %v722
  %v1033 = vpack.c.bf16 %v725, %v724
  %v1034 = vpack.c.bf16 %v727, %v726
  %v1035 = vpack.c.bf16 %v729, %v728
  %1040 = vrot.lane.b32.xlu0 %v1032, 32
  %v1041 = vpop.permute.xlu0 %1040
  %1042 = vrot.lane.b32.xlu0 %v1033, 32
  %v1043 = vpop.permute.xlu0 %1042
  %1044 = vrot.lane.b32.xlu0 %v1034, 32
  %v1045 = vpop.permute.xlu0 %1044
  %1046 = vrot.lane.b32.xlu0 %v1035, 32
  %v1047 = vpop.permute.xlu0 %1046
  %v1052 = vunpack.c.l.b16 %v433
  %v1053 = vunpack.c.l.b16 %v434
  %v1054 = vunpack.c.l.b16 %v435
  %v1055 = vunpack.c.l.b16 %v436
  %v1056 = vpack.c.b16 %v1053, %v1052
  %v1057 = vpack.c.b16 %v1055, %v1054
  %v1061 = vsel %vm758, %v1041, 0
  %v1064 = vsel %vm758, %v1043, 0
  %v1067 = vsel %vm758, %v1045, 0
  %v1070 = vsel %vm758, %v1047, 0
  %1072 = vmatpush.bf16.msra.mxu0 0
  %1073 = vmatpush.bf16.msra.mxu0 0
  %1074 = vmatpush.bf16.msra.mxu0 0
  %1075 = vmatpush.bf16.msra.mxu0 0
  %1076 = vmatpush.bf16.msra.mxu0 0
  %1077 = vmatpush.bf16.msra.mxu0 0
  %1078 = vmatpush.bf16.msra.mxu0 %v1057
  %1079 = vmatpush.bf16.msra.mxu0 %v1056
  %1080 = vmatmul.bf16.gmra.mxu0 %v1061
  %v1081 = vpop.f32.mrf.mxu0
  %v1082 = vadd.f32 0.0, %v1081
  %v1083 = vpop.f32.mrf.mxu0
  %v1084 = vadd.f32 0.0, %v1083
  %1085 = vmatmul.bf16.gmra.mxu0 %v1064
  %v1086 = vpop.f32.mrf.mxu0
  %v1087 = vadd.f32 0.0, %v1086
  %v1088 = vpop.f32.mrf.mxu0
  %v1089 = vadd.f32 0.0, %v1088
  %1090 = vmatmul.bf16.gmra.mxu0 %v1067
  %v1091 = vpop.f32.mrf.mxu0
  %v1092 = vadd.f32 0.0, %v1091
  %v1093 = vpop.f32.mrf.mxu0
  %v1094 = vadd.f32 0.0, %v1093
  %1095 = vmatmul.bf16.gmra.mxu0 %v1070
  %v1096 = vpop.f32.mrf.mxu0
  %v1097 = vadd.f32 0.0, %v1096
  %v1098 = vpop.f32.mrf.mxu0
  %v1099 = vadd.f32 0.0, %v1098
  %1100 = vdwg.mxu0
  %v1101 = vadd.f32 %v340, %v1082
  %v1102 = vadd.f32 %v342, %v1084
  %v1103 = vadd.f32 %v345, %v1087
  %v1104 = vadd.f32 %v347, %v1089
  %v1105 = vadd.f32 %v350, %v1092
  %v1106 = vadd.f32 %v352, %v1094
  %v1107 = vadd.f32 %v355, %v1097
  %v1108 = vadd.f32 %v357, %v1099
  %v1109 = vsub.f32 0.0, %v1101
  %v1110 = vsub.f32 0.0, %v1102
  %v1111 = vsub.f32 0.0, %v1103
  %v1112 = vsub.f32 0.0, %v1104
  %v1113 = vsub.f32 0.0, %v1105
  %v1114 = vsub.f32 0.0, %v1106
  %v1115 = vsub.f32 0.0, %v1107
  %v1116 = vsub.f32 0.0, %v1108
  %v1117 = vmul.f32 %v1109, 1.442695
  %v1118 = vpow.pop %v1117
  %v1119 = vmul.f32 %v1110, 1.442695
  %v1120 = vpow.pop %v1119
  %v1121 = vmul.f32 %v1111, 1.442695
  %v1122 = vpow.pop %v1121
  %v1123 = vmul.f32 %v1112, 1.442695
  %v1124 = vpow.pop %v1123
  %v1125 = vmul.f32 %v1113, 1.442695
  %v1126 = vpow.pop %v1125
  %v1127 = vmul.f32 %v1114, 1.442695
  %v1128 = vpow.pop %v1127
  %v1129 = vmul.f32 %v1115, 1.442695
  %v1130 = vpow.pop %v1129
  %v1131 = vmul.f32 %v1116, 1.442695
  %v1132 = vpow.pop %v1131
  %v1133 = vadd.f32 %v1118, 1.0
  %v1134 = vadd.f32 %v1120, 1.0
  %v1135 = vadd.f32 %v1122, 1.0
  %v1136 = vadd.f32 %v1124, 1.0
  %v1137 = vadd.f32 %v1126, 1.0
  %v1138 = vadd.f32 %v1128, 1.0
  %v1139 = vadd.f32 %v1130, 1.0
  %v1140 = vadd.f32 %v1132, 1.0
  %v1141 = vrcp.pop %v1133
  %v1142 = vrcp.pop %v1134
  %v1143 = vrcp.pop %v1135
  %v1144 = vrcp.pop %v1136
  %v1145 = vrcp.pop %v1137
  %v1146 = vrcp.pop %v1138
  %v1147 = vrcp.pop %v1139
  %v1148 = vrcp.pop %v1140
  %v1149 = vtanh.pop %v1101
  %v1150 = vtanh.pop %v1102
  %v1151 = vtanh.pop %v1103
  %v1152 = vtanh.pop %v1104
  %v1153 = vtanh.pop %v1105
  %v1154 = vtanh.pop %v1106
  %v1155 = vtanh.pop %v1107
  %v1156 = vtanh.pop %v1108
  %v1157 = vsel %vm441, %v1149, %v1141
  %v1158 = vsel %vm441, %v1150, %v1142
  %v1159 = vsel %vm441, %v1151, %v1143
  %v1160 = vsel %vm441, %v1152, %v1144
  %v1161 = vsel %vm441, %v1153, %v1145
  %v1162 = vsel %vm441, %v1154, %v1146
  %v1163 = vsel %vm441, %v1155, %v1147
  %v1164 = vsel %vm441, %v1156, %v1148
  %1173 = vrot.lane.b32.xlu0 %v674, 32
  %v1174 = vpop.permute.xlu0 %1173
  %1175 = vrot.lane.b32.xlu0 %v675, 32
  %v1176 = vpop.permute.xlu0 %1175
  %1177 = vrot.lane.b32.xlu0 %v676, 32
  %v1178 = vpop.permute.xlu0 %1177
  %1179 = vrot.lane.b32.xlu0 %v677, 32
  %v1180 = vpop.permute.xlu0 %1179
  %1181 = vrot.lane.b32.xlu0 %v678, 32
  %v1182 = vpop.permute.xlu0 %1181
  %1183 = vrot.lane.b32.xlu0 %v679, 32
  %v1184 = vpop.permute.xlu0 %1183
  %1185 = vrot.lane.b32.xlu0 %v680, 32
  %v1186 = vpop.permute.xlu0 %1185
  %1187 = vrot.lane.b32.xlu0 %v681, 32
  %v1188 = vpop.permute.xlu0 %1187
  %v1197 = vmul.f32 %v1157, %v1174
  %v1198 = vmul.f32 %v1158, %v1176
  %v1199 = vmul.f32 %v1159, %v1178
  %v1200 = vmul.f32 %v1160, %v1180
  %v1201 = vmul.f32 %v1161, %v1182
  %v1202 = vmul.f32 %v1162, %v1184
  %v1203 = vmul.f32 %v1163, %v1186
  %v1204 = vmul.f32 %v1164, %v1188
  %1213 = vrot.lane.b32.xlu0 %v1157, 64
  %v1214 = vpop.permute.xlu0 %1213
  %1215 = vrot.lane.b32.xlu0 %v1158, 64
  %v1216 = vpop.permute.xlu0 %1215
  %1217 = vrot.lane.b32.xlu0 %v1159, 64
  %v1218 = vpop.permute.xlu0 %1217
  %1219 = vrot.lane.b32.xlu0 %v1160, 64
  %v1220 = vpop.permute.xlu0 %1219
  %1221 = vrot.lane.b32.xlu0 %v1161, 64
  %v1222 = vpop.permute.xlu0 %1221
  %1223 = vrot.lane.b32.xlu0 %v1162, 64
  %v1224 = vpop.permute.xlu0 %1223
  %1225 = vrot.lane.b32.xlu0 %v1163, 64
  %v1226 = vpop.permute.xlu0 %1225
  %1227 = vrot.lane.b32.xlu0 %v1164, 64
  %v1228 = vpop.permute.xlu0 %1227
  %v1237 = vmul.f32 %v1157, %v1214
  %v1238 = vmul.f32 %v1158, %v1216
  %v1239 = vmul.f32 %v1159, %v1218
  %v1240 = vmul.f32 %v1160, %v1220
  %v1241 = vmul.f32 %v1161, %v1222
  %v1242 = vmul.f32 %v1162, %v1224
  %v1243 = vmul.f32 %v1163, %v1226
  %v1244 = vmul.f32 %v1164, %v1228
  %1253 = vrot.lane.b32.xlu0 %v1237, 32
  %v1254 = vpop.permute.xlu0 %1253
  %1255 = vrot.lane.b32.xlu0 %v1238, 32
  %v1256 = vpop.permute.xlu0 %1255
  %1257 = vrot.lane.b32.xlu0 %v1239, 32
  %v1258 = vpop.permute.xlu0 %1257
  %1259 = vrot.lane.b32.xlu0 %v1240, 32
  %v1260 = vpop.permute.xlu0 %1259
  %1261 = vrot.lane.b32.xlu0 %v1241, 32
  %v1262 = vpop.permute.xlu0 %1261
  %1263 = vrot.lane.b32.xlu0 %v1242, 32
  %v1264 = vpop.permute.xlu0 %1263
  %1265 = vrot.lane.b32.xlu0 %v1243, 32
  %v1266 = vpop.permute.xlu0 %1265
  %1267 = vrot.lane.b32.xlu0 %v1244, 32
  %v1268 = vpop.permute.xlu0 %1267
  %v1277 = vadd.f32 %v1197, %v1254
  %v1278 = vadd.f32 %v1198, %v1256
  %v1279 = vadd.f32 %v1199, %v1258
  %v1280 = vadd.f32 %v1200, %v1260
  %v1281 = vadd.f32 %v1201, %v1262
  %v1282 = vadd.f32 %v1202, %v1264
  %v1283 = vadd.f32 %v1203, %v1266
  %v1284 = vadd.f32 %v1204, %v1268
  %v1285 = vtanh.pop %v1277
  %v1286 = vtanh.pop %v1278
  %v1287 = vtanh.pop %v1279
  %v1288 = vtanh.pop %v1280
  %v1289 = vtanh.pop %v1281
  %v1290 = vtanh.pop %v1282
  %v1291 = vtanh.pop %v1283
  %v1292 = vtanh.pop %v1284
  %1301 = vrot.lane.b32.xlu0 %v1285, 64
  %v1302 = vpop.permute.xlu0 %1301
  %1303 = vrot.lane.b32.xlu0 %v1286, 64
  %v1304 = vpop.permute.xlu0 %1303
  %1305 = vrot.lane.b32.xlu0 %v1287, 64
  %v1306 = vpop.permute.xlu0 %1305
  %1307 = vrot.lane.b32.xlu0 %v1288, 64
  %v1308 = vpop.permute.xlu0 %1307
  %1309 = vrot.lane.b32.xlu0 %v1289, 64
  %v1310 = vpop.permute.xlu0 %1309
  %1311 = vrot.lane.b32.xlu0 %v1290, 64
  %v1312 = vpop.permute.xlu0 %1311
  %1313 = vrot.lane.b32.xlu0 %v1291, 64
  %v1314 = vpop.permute.xlu0 %1313
  %1315 = vrot.lane.b32.xlu0 %v1292, 64
  %v1316 = vpop.permute.xlu0 %1315
  %v1325 = vmul.f32 %v1157, %v1302
  %v1326 = vmul.f32 %v1158, %v1304
  %v1327 = vmul.f32 %v1159, %v1306
  %v1328 = vmul.f32 %v1160, %v1308
  %v1329 = vmul.f32 %v1161, %v1310
  %v1330 = vmul.f32 %v1162, %v1312
  %v1331 = vmul.f32 %v1163, %v1314
  %v1332 = vmul.f32 %v1164, %v1316
  %v1333 = vperm.slane %v35, 0
  %1335 = vrot.lane.b32.xlu0 %v1333, 96
  %v1336 = vpop.permute.xlu0 %1335
  %v1338 = vmul.f32 %v578, %v1336
  %v1339 = vmul.f32 %v579, %v1336
  %v1340 = vmul.f32 %v580, %v1336
  %v1341 = vmul.f32 %v581, %v1336
  %v1342 = vmul.f32 %v582, %v1336
  %v1343 = vmul.f32 %v583, %v1336
  %v1344 = vmul.f32 %v584, %v1336
  %v1345 = vmul.f32 %v585, %v1336
  %1346 = vrot.lane.b32.xlu0 %v1333, 64
  %v1347 = vpop.permute.xlu0 %1346
  %v1349 = vmul.f32 %v1325, %v1347
  %v1350 = vmul.f32 %v1326, %v1347
  %v1351 = vmul.f32 %v1327, %v1347
  %v1352 = vmul.f32 %v1328, %v1347
  %v1353 = vmul.f32 %v1329, %v1347
  %v1354 = vmul.f32 %v1330, %v1347
  %v1355 = vmul.f32 %v1331, %v1347
  %v1356 = vmul.f32 %v1332, %v1347
  %v1357 = vadd.f32 %v1338, %v1349
  %v1358 = vadd.f32 %v1339, %v1350
  %v1359 = vadd.f32 %v1340, %v1351
  %v1360 = vadd.f32 %v1341, %v1352
  %v1361 = vadd.f32 %v1342, %v1353
  %v1362 = vadd.f32 %v1343, %v1354
  %v1363 = vadd.f32 %v1344, %v1355
  %v1364 = vadd.f32 %v1345, %v1356
  %1373 = vrot.lane.b32.xlu0 %v1357, 32
  %v1374 = vpop.permute.xlu0 %1373
  %1375 = vrot.lane.b32.xlu0 %v1358, 32
  %v1376 = vpop.permute.xlu0 %1375
  %1377 = vrot.lane.b32.xlu0 %v1359, 32
  %v1378 = vpop.permute.xlu0 %1377
  %1379 = vrot.lane.b32.xlu0 %v1360, 32
  %v1380 = vpop.permute.xlu0 %1379
  %1381 = vrot.lane.b32.xlu0 %v1361, 32
  %v1382 = vpop.permute.xlu0 %1381
  %1383 = vrot.lane.b32.xlu0 %v1362, 32
  %v1384 = vpop.permute.xlu0 %1383
  %1385 = vrot.lane.b32.xlu0 %v1363, 32
  %v1386 = vpop.permute.xlu0 %1385
  %1387 = vrot.lane.b32.xlu0 %v1364, 32
  %v1388 = vpop.permute.xlu0 %1387
  %v1397 = vsel %vm758, %v1374, 0.0
  %1398 = vadd.xlane.f32.xlu0 %v1397
  %v1399 = vpop.xlane.xlu0 %1398
  %v1400 = vsel %vm758, %v1376, 0.0
  %1401 = vadd.xlane.f32.xlu0 %v1400
  %v1402 = vpop.xlane.xlu0 %1401
  %v1403 = vsel %vm758, %v1378, 0.0
  %1404 = vadd.xlane.f32.xlu0 %v1403
  %v1405 = vpop.xlane.xlu0 %1404
  %v1406 = vsel %vm758, %v1380, 0.0
  %1407 = vadd.xlane.f32.xlu0 %v1406
  %v1408 = vpop.xlane.xlu0 %1407
  %v1409 = vsel %vm758, %v1382, 0.0
  %1410 = vadd.xlane.f32.xlu0 %v1409
  %v1411 = vpop.xlane.xlu0 %1410
  %v1412 = vsel %vm758, %v1384, 0.0
  %1413 = vadd.xlane.f32.xlu0 %v1412
  %v1414 = vpop.xlane.xlu0 %1413
  %v1415 = vsel %vm758, %v1386, 0.0
  %1416 = vadd.xlane.f32.xlu0 %v1415
  %v1417 = vpop.xlane.xlu0 %1416
  %v1418 = vsel %vm758, %v1388, 0.0
  %1419 = vadd.xlane.f32.xlu0 %v1418
  %v1420 = vpop.xlane.xlu0 %1419
  %v1421 = vadd.f32 %v1399, %v111
  %v1422 = vadd.f32 %v1402, %v111
  %v1423 = vadd.f32 %v1405, %v111
  %v1424 = vadd.f32 %v1408, %v111
  %v1425 = vadd.f32 %v1411, %v111
  %v1426 = vadd.f32 %v1414, %v111
  %v1427 = vadd.f32 %v1417, %v111
  %v1428 = vadd.f32 %v1420, %v111
  %v1429 = vmul.f32 %v1024, %v1336
  %v1430 = vmul.f32 %v1025, %v1336
  %v1431 = vmul.f32 %v1026, %v1336
  %v1432 = vmul.f32 %v1027, %v1336
  %v1433 = vmul.f32 %v1028, %v1336
  %v1434 = vmul.f32 %v1029, %v1336
  %v1435 = vmul.f32 %v1030, %v1336
  %v1436 = vmul.f32 %v1031, %v1336
  %v1437 = vmul.f32 %v722, %v1347
  %v1438 = vmul.f32 %v723, %v1347
  %v1439 = vmul.f32 %v724, %v1347
  %v1440 = vmul.f32 %v725, %v1347
  %v1441 = vmul.f32 %v726, %v1347
  %v1442 = vmul.f32 %v727, %v1347
  %v1443 = vmul.f32 %v728, %v1347
  %v1444 = vmul.f32 %v729, %v1347
  %v1445 = vadd.f32 %v1429, %v1437
  %v1446 = vadd.f32 %v1430, %v1438
  %v1447 = vadd.f32 %v1431, %v1439
  %v1448 = vadd.f32 %v1432, %v1440
  %v1449 = vadd.f32 %v1433, %v1441
  %v1450 = vadd.f32 %v1434, %v1442
  %v1451 = vadd.f32 %v1435, %v1443
  %v1452 = vadd.f32 %v1436, %v1444
  %1461 = vrot.lane.b32.xlu0 %v1445, 32
  %v1462 = vpop.permute.xlu0 %1461
  %1463 = vrot.lane.b32.xlu0 %v1446, 32
  %v1464 = vpop.permute.xlu0 %1463
  %1465 = vrot.lane.b32.xlu0 %v1447, 32
  %v1466 = vpop.permute.xlu0 %1465
  %1467 = vrot.lane.b32.xlu0 %v1448, 32
  %v1468 = vpop.permute.xlu0 %1467
  %1469 = vrot.lane.b32.xlu0 %v1449, 32
  %v1470 = vpop.permute.xlu0 %1469
  %1471 = vrot.lane.b32.xlu0 %v1450, 32
  %v1472 = vpop.permute.xlu0 %1471
  %1473 = vrot.lane.b32.xlu0 %v1451, 32
  %v1474 = vpop.permute.xlu0 %1473
  %1475 = vrot.lane.b32.xlu0 %v1452, 32
  %v1476 = vpop.permute.xlu0 %1475
  %v1485 = vsel %vm758, %v1462, 0.0
  %1486 = vadd.xlane.f32.xlu0 %v1485
  %v1487 = vpop.xlane.xlu0 %1486
  %v1488 = vsel %vm758, %v1464, 0.0
  %1489 = vadd.xlane.f32.xlu0 %v1488
  %v1490 = vpop.xlane.xlu0 %1489
  %v1491 = vsel %vm758, %v1466, 0.0
  %1492 = vadd.xlane.f32.xlu0 %v1491
  %v1493 = vpop.xlane.xlu0 %1492
  %v1494 = vsel %vm758, %v1468, 0.0
  %1495 = vadd.xlane.f32.xlu0 %v1494
  %v1496 = vpop.xlane.xlu0 %1495
  %v1497 = vsel %vm758, %v1470, 0.0
  %1498 = vadd.xlane.f32.xlu0 %v1497
  %v1499 = vpop.xlane.xlu0 %1498
  %v1500 = vsel %vm758, %v1472, 0.0
  %1501 = vadd.xlane.f32.xlu0 %v1500
  %v1502 = vpop.xlane.xlu0 %1501
  %v1503 = vsel %vm758, %v1474, 0.0
  %1504 = vadd.xlane.f32.xlu0 %v1503
  %v1505 = vpop.xlane.xlu0 %1504
  %v1506 = vsel %vm758, %v1476, 0.0
  %1507 = vadd.xlane.f32.xlu0 %v1506
  %v1508 = vpop.xlane.xlu0 %1507
  %v1509 = vadd.f32 %v1487, %v111
  %v1510 = vadd.f32 %v1490, %v111
  %v1511 = vadd.f32 %v1493, %v111
  %v1512 = vadd.f32 %v1496, %v111
  %v1513 = vadd.f32 %v1499, %v111
  %v1514 = vadd.f32 %v1502, %v111
  %v1515 = vadd.f32 %v1505, %v111
  %v1516 = vadd.f32 %v1508, %v111
  %v1517 = vmax.f32 %v1421, %v1509
  %v1518 = vmax.f32 %v1422, %v1510
  %v1519 = vmax.f32 %v1423, %v1511
  %v1520 = vmax.f32 %v1424, %v1512
  %v1521 = vmax.f32 %v1425, %v1513
  %v1522 = vmax.f32 %v1426, %v1514
  %v1523 = vmax.f32 %v1427, %v1515
  %v1524 = vmax.f32 %v1428, %v1516
  %v1525 = vsub.f32 %v1421, %v1517
  %v1526 = vsub.f32 %v1422, %v1518
  %v1527 = vsub.f32 %v1423, %v1519
  %v1528 = vsub.f32 %v1424, %v1520
  %v1529 = vsub.f32 %v1425, %v1521
  %v1530 = vsub.f32 %v1426, %v1522
  %v1531 = vsub.f32 %v1427, %v1523
  %v1532 = vsub.f32 %v1428, %v1524
  %v1533 = vmul.f32 %v1525, 1.442695
  %v1534 = vpow.pop %v1533
  %v1535 = vmul.f32 %v1526, 1.442695
  %v1536 = vpow.pop %v1535
  %v1537 = vmul.f32 %v1527, 1.442695
  %v1538 = vpow.pop %v1537
  %v1539 = vmul.f32 %v1528, 1.442695
  %v1540 = vpow.pop %v1539
  %v1541 = vmul.f32 %v1529, 1.442695
  %v1542 = vpow.pop %v1541
  %v1543 = vmul.f32 %v1530, 1.442695
  %v1544 = vpow.pop %v1543
  %v1545 = vmul.f32 %v1531, 1.442695
  %v1546 = vpow.pop %v1545
  %v1547 = vmul.f32 %v1532, 1.442695
  %v1548 = vpow.pop %v1547
  %v1549 = vsub.f32 %v1509, %v1517
  %v1550 = vsub.f32 %v1510, %v1518
  %v1551 = vsub.f32 %v1511, %v1519
  %v1552 = vsub.f32 %v1512, %v1520
  %v1553 = vsub.f32 %v1513, %v1521
  %v1554 = vsub.f32 %v1514, %v1522
  %v1555 = vsub.f32 %v1515, %v1523
  %v1556 = vsub.f32 %v1516, %v1524
  %v1557 = vmul.f32 %v1549, 1.442695
  %v1558 = vpow.pop %v1557
  %v1559 = vmul.f32 %v1550, 1.442695
  %v1560 = vpow.pop %v1559
  %v1561 = vmul.f32 %v1551, 1.442695
  %v1562 = vpow.pop %v1561
  %v1563 = vmul.f32 %v1552, 1.442695
  %v1564 = vpow.pop %v1563
  %v1565 = vmul.f32 %v1553, 1.442695
  %v1566 = vpow.pop %v1565
  %v1567 = vmul.f32 %v1554, 1.442695
  %v1568 = vpow.pop %v1567
  %v1569 = vmul.f32 %v1555, 1.442695
  %v1570 = vpow.pop %v1569
  %v1571 = vmul.f32 %v1556, 1.442695
  %v1572 = vpow.pop %v1571
  %v1573 = vadd.f32 %v1534, %v1558
  %v1574 = vadd.f32 %v1536, %v1560
  %v1575 = vadd.f32 %v1538, %v1562
  %v1576 = vadd.f32 %v1540, %v1564
  %v1577 = vadd.f32 %v1542, %v1566
  %v1578 = vadd.f32 %v1544, %v1568
  %v1579 = vadd.f32 %v1546, %v1570
  %v1580 = vadd.f32 %v1548, %v1572
  %v1581 = vrcp.pop %v1573
  %v1582 = vrcp.pop %v1574
  %v1583 = vrcp.pop %v1575
  %v1584 = vrcp.pop %v1576
  %v1585 = vrcp.pop %v1577
  %v1586 = vrcp.pop %v1578
  %v1587 = vrcp.pop %v1579
  %v1588 = vrcp.pop %v1580
  %v1589 = vmul.f32 %v1534, %v1581
  %v1590 = vmul.f32 %v1536, %v1582
  %v1591 = vmul.f32 %v1538, %v1583
  %v1592 = vmul.f32 %v1540, %v1584
  %v1593 = vmul.f32 %v1542, %v1585
  %v1594 = vmul.f32 %v1544, %v1586
  %v1595 = vmul.f32 %v1546, %v1587
  %v1596 = vmul.f32 %v1548, %v1588
  %1598 = vset.pattern.permute.xlu0 40
  %1599 = vperm.xlu0 %1598, %v1589
  %v1600 = vpop.permute.xlu0 %1599
  %1603 = vset.pattern.permute.xlu0 40
  %1604 = vperm.xlu0 %1603, %v1590
  %v1605 = vpop.permute.xlu0 %1604
  %1608 = vset.pattern.permute.xlu0 40
  %1609 = vperm.xlu0 %1608, %v1591
  %v1610 = vpop.permute.xlu0 %1609
  %1613 = vset.pattern.permute.xlu0 40
  %1614 = vperm.xlu0 %1613, %v1592
  %v1615 = vpop.permute.xlu0 %1614
  %1618 = vset.pattern.permute.xlu0 40
  %1619 = vperm.xlu0 %1618, %v1593
  %v1620 = vpop.permute.xlu0 %1619
  %1623 = vset.pattern.permute.xlu0 40
  %1624 = vperm.xlu0 %1623, %v1594
  %v1625 = vpop.permute.xlu0 %1624
  %1628 = vset.pattern.permute.xlu0 40
  %1629 = vperm.xlu0 %1628, %v1595
  %v1630 = vpop.permute.xlu0 %1629
  %1633 = vset.pattern.permute.xlu0 40
  %1634 = vperm.xlu0 %1633, %v1596
  %v1635 = vpop.permute.xlu0 %1634
  %v1637 = vmul.f32 %v1600, %v174
  %v1638 = vmul.f32 %v1605, %v175
  %v1639 = vmul.f32 %v1610, %v176
  %v1640 = vmul.f32 %v1615, %v177
  %v1641 = vmul.f32 %v1620, %v178
  %v1642 = vmul.f32 %v1625, %v179
  %v1643 = vmul.f32 %v1630, %v180
  %v1644 = vmul.f32 %v1635, %v181
  %v1645 = vmul.f32 %v1558, %v1581
  %v1646 = vmul.f32 %v1560, %v1582
  %v1647 = vmul.f32 %v1562, %v1583
  %v1648 = vmul.f32 %v1564, %v1584
  %v1649 = vmul.f32 %v1566, %v1585
  %v1650 = vmul.f32 %v1568, %v1586
  %v1651 = vmul.f32 %v1570, %v1587
  %v1652 = vmul.f32 %v1572, %v1588
  %1654 = vset.pattern.permute.xlu0 40
  %1655 = vperm.xlu0 %1654, %v1645
  %v1656 = vpop.permute.xlu0 %1655
  %1659 = vset.pattern.permute.xlu0 40
  %1660 = vperm.xlu0 %1659, %v1646
  %v1661 = vpop.permute.xlu0 %1660
  %1664 = vset.pattern.permute.xlu0 40
  %1665 = vperm.xlu0 %1664, %v1647
  %v1666 = vpop.permute.xlu0 %1665
  %1669 = vset.pattern.permute.xlu0 40
  %1670 = vperm.xlu0 %1669, %v1648
  %v1671 = vpop.permute.xlu0 %1670
  %1674 = vset.pattern.permute.xlu0 40
  %1675 = vperm.xlu0 %1674, %v1649
  %v1676 = vpop.permute.xlu0 %1675
  %1679 = vset.pattern.permute.xlu0 40
  %1680 = vperm.xlu0 %1679, %v1650
  %v1681 = vpop.permute.xlu0 %1680
  %1684 = vset.pattern.permute.xlu0 40
  %1685 = vperm.xlu0 %1684, %v1651
  %v1686 = vpop.permute.xlu0 %1685
  %1689 = vset.pattern.permute.xlu0 40
  %1690 = vperm.xlu0 %1689, %v1652
  %v1691 = vpop.permute.xlu0 %1690
  %v1693 = vmul.f32 %v1656, %v272
  %v1694 = vmul.f32 %v1661, %v273
  %v1695 = vmul.f32 %v1666, %v274
  %v1696 = vmul.f32 %v1671, %v275
  %v1697 = vmul.f32 %v1676, %v276
  %v1698 = vmul.f32 %v1681, %v277
  %v1699 = vmul.f32 %v1686, %v278
  %v1700 = vmul.f32 %v1691, %v279
  %v1701 = vadd.f32 %v1637, %v1693
  %v1702 = vadd.f32 %v1638, %v1694
  %v1703 = vadd.f32 %v1639, %v1695
  %v1704 = vadd.f32 %v1640, %v1696
  %v1705 = vadd.f32 %v1641, %v1697
  %v1706 = vadd.f32 %v1642, %v1698
  %v1707 = vadd.f32 %v1643, %v1699
  %v1708 = vadd.f32 %v1644, %v1700
  %v1709 = vpack.c.bf16 %v1702, %v1701
  %v1710 = vpack.c.bf16 %v1704, %v1703
  %v1711 = vpack.c.bf16 %v1706, %v1705
  %v1712 = vpack.c.bf16 %v1708, %v1707
  %v1713 = vld [vmem:[%s2 + $0x50] sm:$0xf]
  %v1714 = vld [vmem:[%s2 + $0x58] sm:$0xf]
  %v1717 = vunpack.c.l.b16 %v1713
  %v1718 = vunpack.c.l.b16 %v1714
  %v1719 = vpack.c.b16 %v1718, %v1717
  %v1722 = vsel %vm65, %v1709, 0
  %v1725 = vsel %vm65, %v1710, 0
  %v1728 = vsel %vm65, %v1711, 0
  %v1731 = vsel %vm65, %v1712, 0
  %1733 = vmatpush.bf16.msra.mxu0 0
  %1734 = vmatpush.bf16.msra.mxu0 0
  %1735 = vmatpush.bf16.msra.mxu0 0
  %1736 = vmatpush.bf16.msra.mxu0 0
  %1737 = vmatpush.bf16.msra.mxu0 0
  %1738 = vmatpush.bf16.msra.mxu0 0
  %1739 = vmatpush.bf16.msra.mxu0 0
  %1740 = vmatpush.bf16.msra.mxu0 %v1719
  %1741 = vmatmul.bf16.gmra.mxu0 %v1722
  %v1742 = vpop.f32.mrf.mxu0
  %v1743 = vadd.f32 0.0, %v1742
  %v1744 = vpop.f32.mrf.mxu0
  %v1745 = vadd.f32 0.0, %v1744
  %1746 = vmatmul.bf16.gmra.mxu0 %v1725
  %v1747 = vpop.f32.mrf.mxu0
  %v1748 = vadd.f32 0.0, %v1747
  %v1749 = vpop.f32.mrf.mxu0
  %v1750 = vadd.f32 0.0, %v1749
  %1751 = vmatmul.bf16.gmra.mxu0 %v1728
  %v1752 = vpop.f32.mrf.mxu0
  %v1753 = vadd.f32 0.0, %v1752
  %v1754 = vpop.f32.mrf.mxu0
  %v1755 = vadd.f32 0.0, %v1754
  %1756 = vmatmul.bf16.gmra.mxu0 %v1731
  %v1757 = vpop.f32.mrf.mxu0
  %v1758 = vadd.f32 0.0, %v1757
  %v1759 = vpop.f32.mrf.mxu0
  %v1760 = vadd.f32 0.0, %v1759
  %1761 = vdwg.mxu0
  %v1762 = vpack.c.bf16 %v1745, %v1743
  %v1763 = vpack.c.bf16 %v1750, %v1748
  %v1764 = vpack.c.bf16 %v1755, %v1753
  %v1765 = vpack.c.bf16 %v1760, %v1758
  %1766 = vrot.lane.b32.xlu0 %v111, 96
  %v1767 = vpop.permute.xlu0 %1766
  %1769 = vmatpush.bf16.msra.mxu0 0
  %1770 = vmatpush.bf16.msra.mxu0 0
  %1771 = vmatpush.bf16.msra.mxu0 0
  %1772 = vmatpush.bf16.msra.mxu0 0
  %1773 = vmatpush.bf16.msra.mxu0 %v1765
  %1774 = vmatpush.bf16.msra.mxu0 %v1764
  %1775 = vmatpush.bf16.msra.mxu0 %v1763
  %1776 = vmatpush.bf16.msra.mxu0 %v1762
  %1777 = vmatmul.bf16.gmra.mxu0 %v134
  %v1778 = vpop.f32.mrf.mxu0
  %v1779 = vadd.f32 %v1767, %v1778
  %v1780 = vpop.f32.mrf.mxu0
  %v1781 = vadd.f32 %v1767, %v1780
  %1782 = vmatmul.bf16.gmra.mxu0 %v137
  %v1783 = vpop.f32.mrf.mxu0
  %v1784 = vadd.f32 %v1767, %v1783
  %v1785 = vpop.f32.mrf.mxu0
  %v1786 = vadd.f32 %v1767, %v1785
  %1787 = vmatmul.bf16.gmra.mxu0 %v140
  %v1788 = vpop.f32.mrf.mxu0
  %v1789 = vadd.f32 %v1767, %v1788
  %v1790 = vpop.f32.mrf.mxu0
  %v1791 = vadd.f32 %v1767, %v1790
  %1792 = vmatmul.bf16.gmra.mxu0 %v143
  %v1793 = vpop.f32.mrf.mxu0
  %v1794 = vadd.f32 %v1767, %v1793
  %v1795 = vpop.f32.mrf.mxu0
  %v1796 = vadd.f32 %v1767, %v1795
  %1797 = vdwg.mxu0
  %vm1798 = vcmask 64512
  %v1799 = vsel %vm1798, %v1779, -inf
  %1800 = vmax.xlane.f32.xlu0 %v1799
  %v1801 = vpop.xlane.xlu0 %1800
  %v1802 = vsel %vm1798, %v1781, -inf
  %1803 = vmax.xlane.f32.xlu0 %v1802
  %v1804 = vpop.xlane.xlu0 %1803
  %v1805 = vsel %vm1798, %v1784, -inf
  %1806 = vmax.xlane.f32.xlu0 %v1805
  %v1807 = vpop.xlane.xlu0 %1806
  %v1808 = vsel %vm1798, %v1786, -inf
  %1809 = vmax.xlane.f32.xlu0 %v1808
  %v1810 = vpop.xlane.xlu0 %1809
  %v1811 = vsel %vm1798, %v1789, -inf
  %1812 = vmax.xlane.f32.xlu0 %v1811
  %v1813 = vpop.xlane.xlu0 %1812
  %v1814 = vsel %vm1798, %v1791, -inf
  %1815 = vmax.xlane.f32.xlu0 %v1814
  %v1816 = vpop.xlane.xlu0 %1815
  %v1817 = vsel %vm1798, %v1794, -inf
  %1818 = vmax.xlane.f32.xlu0 %v1817
  %v1819 = vpop.xlane.xlu0 %1818
  %v1820 = vsel %vm1798, %v1796, -inf
  %1821 = vmax.xlane.f32.xlu0 %v1820
  %v1822 = vpop.xlane.xlu0 %1821
  %v1823 = vsub.f32 %v1779, %v1801
  %v1824 = vsub.f32 %v1781, %v1804
  %v1825 = vsub.f32 %v1784, %v1807
  %v1826 = vsub.f32 %v1786, %v1810
  %v1827 = vsub.f32 %v1789, %v1813
  %v1828 = vsub.f32 %v1791, %v1816
  %v1829 = vsub.f32 %v1794, %v1819
  %v1830 = vsub.f32 %v1796, %v1822
  %v1831 = vmul.f32 %v1823, 1.442695
  %v1832 = vpow.pop %v1831
  %v1833 = vmul.f32 %v1824, 1.442695
  %v1834 = vpow.pop %v1833
  %v1835 = vmul.f32 %v1825, 1.442695
  %v1836 = vpow.pop %v1835
  %v1837 = vmul.f32 %v1826, 1.442695
  %v1838 = vpow.pop %v1837
  %v1839 = vmul.f32 %v1827, 1.442695
  %v1840 = vpow.pop %v1839
  %v1841 = vmul.f32 %v1828, 1.442695
  %v1842 = vpow.pop %v1841
  %v1843 = vmul.f32 %v1829, 1.442695
  %v1844 = vpow.pop %v1843
  %v1845 = vmul.f32 %v1830, 1.442695
  %v1846 = vpow.pop %v1845
  %v1847 = vsel %vm1798, %v1832, 0.0
  %1848 = vadd.xlane.f32.xlu0 %v1847
  %v1849 = vpop.xlane.xlu0 %1848
  %v1850 = vsel %vm1798, %v1834, 0.0
  %1851 = vadd.xlane.f32.xlu0 %v1850
  %v1852 = vpop.xlane.xlu0 %1851
  %v1853 = vsel %vm1798, %v1836, 0.0
  %1854 = vadd.xlane.f32.xlu0 %v1853
  %v1855 = vpop.xlane.xlu0 %1854
  %v1856 = vsel %vm1798, %v1838, 0.0
  %1857 = vadd.xlane.f32.xlu0 %v1856
  %v1858 = vpop.xlane.xlu0 %1857
  %v1859 = vsel %vm1798, %v1840, 0.0
  %1860 = vadd.xlane.f32.xlu0 %v1859
  %v1861 = vpop.xlane.xlu0 %1860
  %v1862 = vsel %vm1798, %v1842, 0.0
  %1863 = vadd.xlane.f32.xlu0 %v1862
  %v1864 = vpop.xlane.xlu0 %1863
  %v1865 = vsel %vm1798, %v1844, 0.0
  %1866 = vadd.xlane.f32.xlu0 %v1865
  %v1867 = vpop.xlane.xlu0 %1866
  %v1868 = vsel %vm1798, %v1846, 0.0
  %1869 = vadd.xlane.f32.xlu0 %v1868
  %v1870 = vpop.xlane.xlu0 %1869
  %v1871 = vlog2.pop %v1849
  %v1872 = vmul.f32 %v1871, 0.6931472
  %v1873 = vlog2.pop %v1852
  %v1874 = vmul.f32 %v1873, 0.6931472
  %v1875 = vlog2.pop %v1855
  %v1876 = vmul.f32 %v1875, 0.6931472
  %v1877 = vlog2.pop %v1858
  %v1878 = vmul.f32 %v1877, 0.6931472
  %v1879 = vlog2.pop %v1861
  %v1880 = vmul.f32 %v1879, 0.6931472
  %v1881 = vlog2.pop %v1864
  %v1882 = vmul.f32 %v1881, 0.6931472
  %v1883 = vlog2.pop %v1867
  %v1884 = vmul.f32 %v1883, 0.6931472
  %v1885 = vlog2.pop %v1870
  %v1886 = vmul.f32 %v1885, 0.6931472
  %v1887 = vsub.f32 %v1823, %v1872
  %v1888 = vsub.f32 %v1824, %v1874
  %v1889 = vsub.f32 %v1825, %v1876
  %v1890 = vsub.f32 %v1826, %v1878
  %v1891 = vsub.f32 %v1827, %v1880
  %v1892 = vsub.f32 %v1828, %v1882
  %v1893 = vsub.f32 %v1829, %v1884
  %v1894 = vsub.f32 %v1830, %v1886
  %1895 = vst.msk [vmem:[%s4] sm:$0xff] %vm1798, %v1887
  %1896 = vst.msk [vmem:[%s4 + $0x8] sm:$0xff] %vm1798, %v1888
  %1897 = vst.msk [vmem:[%s4 + $0x10] sm:$0xff] %vm1798, %v1889
  %1898 = vst.msk [vmem:[%s4 + $0x18] sm:$0xff] %vm1798, %v1890
  %1899 = vst.msk [vmem:[%s4 + $0x20] sm:$0xff] %vm1798, %v1891
  %1900 = vst.msk [vmem:[%s4 + $0x28] sm:$0xff] %vm1798, %v1892
  %1901 = vst.msk [vmem:[%s4 + $0x30] sm:$0xff] %vm1798, %v1893
  %1902 = vst.msk [vmem:[%s4 + $0x38] sm:$0xff] %vm1798, %v1894
  // Predicated region
  $region18: #{gcn_jknet_forward.1} parent=0 // pred_check
    _
  $region19: #{gcn_jknet_forward.1} parent=0 // pred_check_branch
    %1904 = sbr.rel (0) target = $region21
  $region20: #{gcn_jknet_forward.1} parent=0 // pred_region
    _
  $region21: #{gcn_jknet_forward.1} parent=0 // pred_fallthru
    _
  // Predicated region
  $region22: #{gcn_jknet_forward.1} parent=0 // pred_check
    _
  $region23: #{gcn_jknet_forward.1} parent=0 // pred_check_branch
    %1906 = sbr.rel (0) target = $region25
  $region24: #{gcn_jknet_forward.1} parent=0 // pred_region
    _
  $region25: #{gcn_jknet_forward.1} parent=0 // pred_fallthru
    _

</llo_original>
